<compile_context>
chip_gen: v5e
topology: v5e:2x2
jax: 0.10.0
libtpu: 0.0.40
codegen_flags: <defaults>
</compile_context>

<pallas_src>
import functools

import jax
import jax.numpy as jnp
from jax.experimental import pallas as pl
from jax.experimental.pallas import tpu as pltpu


# ----------------------------------------------------------------------------
# Tiled projection matmul (feat @ W) on the MXU, bf16 operands, f32 accumulate.
# ----------------------------------------------------------------------------
def _matmul_kernel(a_ref, b_ref, o_ref, acc_ref):
    @pl.when(pl.program_id(2) == 0)
    def _():
        acc_ref[...] = jnp.zeros_like(acc_ref)

    acc_ref[...] += jnp.dot(a_ref[...], b_ref[...],
                            preferred_element_type=jnp.float32)

    @pl.when(pl.program_id(2) == pl.num_programs(2) - 1)
    def _():
        o_ref[...] = acc_ref[...].astype(o_ref.dtype)


def pallas_matmul(a, b, *, out_dtype=jnp.float32, tm=256, tn=256, tk=256):
    """C = A @ B, f32 accumulation, output cast to `out_dtype`."""
    M, K = a.shape
    K2, N = b.shape
    assert K == K2
    tm, tn, tk = min(tm, M), min(tn, N), min(tk, K)
    assert M % tm == 0 and N % tn == 0 and K % tk == 0, (
        "pad matmul operands to tile multiples")
    return pl.pallas_call(
        _matmul_kernel,
        out_shape=jax.ShapeDtypeStruct((M, N), out_dtype),
        grid_spec=pltpu.PrefetchScalarGridSpec(
            num_scalar_prefetch=0,
            grid=(M // tm, N // tn, K // tk),
            in_specs=[pl.BlockSpec((tm, tk), lambda i, j, k: (i, k)),
                      pl.BlockSpec((tk, tn), lambda i, j, k: (k, j))],
            out_specs=pl.BlockSpec((tm, tn), lambda i, j, k: (i, j)),
            scratch_shapes=[pltpu.VMEM((tm, tn), jnp.float32)]),
        compiler_params=pltpu.CompilerParams(
            dimension_semantics=("parallel", "parallel", "arbitrary")),
    )(a, b)


# ----------------------------------------------------------------------------
# Graph attention kernel: masked edge softmax (online) + aggregation + ReLU.
# Grid = (num_dst_tiles, num_src_tiles); src axis is the reduction axis.
# ----------------------------------------------------------------------------
def _rel_graph_attn_kernel(e_dst_ref, e_src_ref, fs_ref, adj_ref, out_ref,
                           m_scr, l_scr, acc_scr,
                           *, num_heads, out_feats, negative_slope):
    j = pl.program_id(1)
    H, D = num_heads, out_feats

    @pl.when(j == 0)
    def _init():
        m_scr[...] = jnp.full_like(m_scr, -1e30)
        l_scr[...] = jnp.zeros_like(l_scr)
        acc_scr[...] = jnp.zeros_like(acc_scr)

    # Hoisted out of the head loop (shared by all heads): float mask for
    # zeroing p (keeps zero-in-degree rows exactly 0) and the additive -inf
    # mask applied to the logits.
    maskf = (adj_ref[...] != 0).astype(jnp.float32)            # (TD, TS)
    neg = (maskf - 1.0) * jnp.float32(1e30)                    # 0 / -1e30

    e_dst = e_dst_ref[...]                                     # (TD, H) f32
    e_src = e_src_ref[...]                                     # (H, TS) f32
    fs = fs_ref[...]                                           # (TS, H*D) bf16

    # Read the running statistics / accumulator once per src-tile iteration.
    m_prev_all = m_scr[...]                                    # (TD, H)
    l_prev_all = l_scr[...]                                    # (TD, H)
    acc_prev = acc_scr[...]                                    # (TD, H*D) f32

    slope = jnp.float32(negative_slope)
    acc_cols = []

    # Static unroll over heads (H is small here).
    # TODO(synk): fold heads into the grid / fori_loop if num_heads grows > ~4.
    for h in range(H):
        d0 = h * D
        # Edge logits e[v,u] = e_src[u] + e_dst[v]; e_src arrives pre-transposed
        # (H, N_src) so no in-kernel transpose is needed.
        logits = e_dst[:, h:h + 1] + e_src[h:h + 1, :]         # (TD, TS) f32
        logits = jnp.maximum(logits, slope * logits)           # leaky-relu
        logits = logits + neg                                  # additive masking

        # Online masked softmax (f32 statistics).
        m_prev = m_prev_all[:, h:h + 1]                        # (TD, 1)
        m_new = jnp.maximum(m_prev, jnp.max(logits, axis=-1, keepdims=True))
        alpha = jnp.exp(m_prev - m_new)
        # maskf multiply keeps fully-masked (zero in-degree) rows at exactly 0.
        p = jnp.exp(logits - m_new) * maskf                    # (TD, TS) f32

        l_scr[:, h:h + 1] = (alpha * l_prev_all[:, h:h + 1]
                             + jnp.sum(p, axis=-1, keepdims=True))
        m_scr[:, h:h + 1] = m_new

        # Unnormalized aggregation on the MXU (bf16 operands, f32 accumulate).
        acc_cols.append(alpha * acc_prev[:, d0:d0 + D]
                        + jnp.dot(p.astype(jnp.bfloat16), fs[:, d0:d0 + D],
                                  preferred_element_type=jnp.float32))

    # Single lane-dense (TD, H*D) accumulator write-back per src tile.
    acc_scr[...] = jnp.concatenate(acc_cols, axis=-1)

    @pl.when(j == pl.num_programs(1) - 1)
    def _finalize():
        denom = l_scr[...]                                     # (TD, H)
        inv = pl.reciprocal(jnp.where(denom > 0.0, denom, 1.0), approx=False)
        acc = acc_scr[...]
        outs = [acc[:, h * D:(h + 1) * D] * inv[:, h:h + 1] for h in range(H)]
        # Single lane-dense (TD, H*D) store per dst tile + final ReLU.
        out_ref[...] = jnp.maximum(
            jnp.concatenate(outs, axis=-1), 0.0).astype(out_ref.dtype)


def relation_graph_conv(feat_src, feat_dst, w_src, w_dst, rel_emb, w_rel, adj,
                        *, num_heads, out_feats, negative_slope=0.2,
                        dst_tile=None, src_tile=None):
    H, D = num_heads, out_feats
    n_src = feat_src.shape[0]
    n_dst = feat_dst.shape[0]
    assert D % 128 == 0, "pad out_feats to a multiple of 128"

    # ---- tile selection (review: bigger tiles, but keep >= 2 dst tiles) ----
    if dst_tile is None:
        dst_tile = 256 if (n_dst % 256 == 0 and n_dst // 256 >= 2) else 128
    if src_tile is None:
        src_tile = next((t for t in (1024, 512, 256, 128) if n_src % t == 0),
                        None)
        assert src_tile is not None, "pad n_src to a multiple of 128"
    assert n_dst % dst_tile == 0 and n_src % src_tile == 0

    # ---- projections: bf16 operands, f32 accumulate, fs emitted as bf16 ----
    fs = pallas_matmul(feat_src.astype(jnp.bfloat16), w_src.astype(jnp.bfloat16),
                       out_dtype=jnp.bfloat16)                 # (N_src, H*D)
    fd = pallas_matmul(feat_dst.astype(jnp.bfloat16), w_dst.astype(jnp.bfloat16),
                       out_dtype=jnp.float32)                  # (N_dst, H*D)

    # ---- tiny per-relation work: keep in XLA, not the per-tile kernel ----
    rel = jnp.dot(rel_emb.reshape(1, -1), w_rel).reshape(H, 2 * D)
    attn_dst = rel[:, :D]                                      # (H, D)
    attn_src = rel[:, D:]                                      # (H, D)
    e_dst = jnp.einsum('nhd,hd->nh', fd.reshape(n_dst, H, D), attn_dst)
    e_src_t = jnp.einsum('nhd,hd->hn',
                         fs.reshape(n_src, H, D).astype(jnp.float32), attn_src)

    adj_i8 = adj.astype(jnp.int8)                              # 4x less HBM traffic

    grid = (n_dst // dst_tile, n_src // src_tile)

    cost = pl.CostEstimate(
        flops=2 * n_dst * n_src * H * D + 8 * n_dst * n_src * H,
        transcendentals=n_dst * n_src * H,
        bytes_accessed=(n_dst * n_src                          # int8 adj
                        + grid[0] * n_src * H * D * 2          # bf16 fs per dst tile
                        + n_dst * H * D * 4                    # f32 output
                        + grid[1] * n_dst * H * 4
                        + grid[0] * n_src * H * 4))

    kernel = functools.partial(_rel_graph_attn_kernel,
                               num_heads=H, out_feats=D,
                               negative_slope=negative_slope)

    # NOTE: per-step VMEM (< ~5 MiB even at src_tile=1024) fits the 32 MiB
    # scoped default on v5e/v6e/v7x; raise vmem_limit_bytes only if tiles are
    # enlarged further on v5e/v6e (re-budget against 64 MiB physical on v7x).
    # TODO(synk): add pipeline_mode=pl.Buffered(3) on fs/adj if xprof shows
    #             exposed DMA after the tile enlargement.
    return pl.pallas_call(
        kernel,
        out_shape=jax.ShapeDtypeStruct((n_dst, H * D), jnp.float32),
        grid_spec=pltpu.PrefetchScalarGridSpec(
            num_scalar_prefetch=0,
            grid=grid,
            in_specs=[
                pl.BlockSpec((dst_tile, H), lambda i, j: (i, 0)),        # e_dst
                pl.BlockSpec((H, src_tile), lambda i, j: (0, j)),        # e_src^T
                pl.BlockSpec((src_tile, H * D), lambda i, j: (j, 0)),    # fs (bf16)
                pl.BlockSpec((dst_tile, src_tile), lambda i, j: (i, j)), # adj (i8)
            ],
            out_specs=pl.BlockSpec((dst_tile, H * D), lambda i, j: (i, 0)),
            scratch_shapes=[
                pltpu.VMEM((dst_tile, H), jnp.float32),        # running max
                pltpu.VMEM((dst_tile, H), jnp.float32),        # running denom
                pltpu.VMEM((dst_tile, H * D), jnp.float32),    # accumulator
            ]),
        compiler_params=pltpu.CompilerParams(
            dimension_semantics=("parallel", "arbitrary")),
        cost_estimate=cost,
    )(e_dst, e_src_t, fs, adj_i8)


# ----------------------------------------------------------------------------
# Pure-JAX reference.  Projections use the same bf16 operand precision as the
# kernel so the check isolates the graph-softmax/aggregation logic; the
# softmax + aggregation themselves are plain f32.
# ----------------------------------------------------------------------------
def _reference(feat_src, feat_dst, w_src, w_dst, rel_emb, w_rel, adj,
               H, D, slope):
    fs = jnp.dot(feat_src.astype(jnp.bfloat16), w_src.astype(jnp.bfloat16),
                 preferred_element_type=jnp.float32)
    fs = fs.astype(jnp.bfloat16).astype(jnp.float32)
    fd = jnp.dot(feat_dst.astype(jnp.bfloat16), w_dst.astype(jnp.bfloat16),
                 preferred_element_type=jnp.float32)
    rel = (rel_emb.reshape(1, -1) @ w_rel).reshape(H, 2 * D)
    fs3 = fs.reshape(-1, H, D)
    fd3 = fd.reshape(-1, H, D)
    e_dst = jnp.sum(fd3 * rel[None, :, :D], axis=-1)           # (N_dst, H)
    e_src = jnp.sum(fs3 * rel[None, :, D:], axis=-1)           # (N_src, H)
    e = e_dst[:, None, :] + e_src[None, :, :]                  # (N_dst, N_src, H)
    e = jnp.where(e >= 0.0, e, slope * e)
    mask = (adj > 0)[:, :, None]
    e = jnp.where(mask, e, -1e30)
    e = e - jnp.max(e, axis=1, keepdims=True)
    p = jnp.where(mask, jnp.exp(e), 0.0)
    denom = jnp.sum(p, axis=1, keepdims=True)
    a = p / jnp.where(denom > 0.0, denom, 1.0)
    out = jnp.einsum('vuh,uhd->vhd', a, fs3).reshape(-1, H * D)
    return jnp.maximum(out, 0.0)


if __name__ == "__main__":
    # Small deterministic problem, sized to exercise the (dst, src) grid.
    N_SRC, N_DST = 512, 256
    F_SRC, F_DST = 256, 128          # in_feats = (F_SRC, F_DST)
    H, D = 2, 128                    # num_heads, out_feats (per head)
    R = 64                           # relation embedding dim

    key = jax.random.PRNGKey(0)
    k = jax.random.split(key, 7)

    feat_src = jax.random.normal(k[0], (N_SRC, F_SRC), dtype=jnp.float32)
    feat_dst = jax.random.normal(k[1], (N_DST, F_DST), dtype=jnp.float32)
    w_src = jax.random.normal(k[2], (F_SRC, H * D), dtype=jnp.float32) * 0.05
    w_dst = jax.random.normal(k[3], (F_DST, H * D), dtype=jnp.float32) * 0.05
    rel_emb = jax.random.normal(k[4], (1, R), dtype=jnp.float32)
    w_rel = jax.random.normal(k[5], (R, H * 2 * D), dtype=jnp.float32) * 0.05
    # Dense bipartite adjacency mask adj[dst, src] in {0,1}.
    adj = (jax.random.uniform(k[6], (N_DST, N_SRC)) < 0.05).astype(jnp.float32)

    out = relation_graph_conv(feat_src, feat_dst, w_src, w_dst,
                              rel_emb, w_rel, adj,
                              num_heads=H, out_feats=D, negative_slope=0.2)
    out = jax.block_until_ready(out)
    assert out.shape == (N_DST, H * D)

    ref = jax.block_until_ready(
        _reference(feat_src, feat_dst, w_src, w_dst, rel_emb, w_rel, adj,
                   H, D, 0.2))
    max_err = float(jnp.max(jnp.abs(out - ref)))
    assert max_err < 5e-2, f"max abs error {max_err}"

    print("KERNEL_OK")
</pallas_src>

<mosaic_0001>
module attributes {stable_mosaic.version = 11 : i64} {
  func.func @_matmul_kernel(%arg0: i32, %arg1: i32, %arg2: i32, %arg3: memref<256x256xbf16, #tpu.memory_space<vmem>>, %arg4: memref<256x256xbf16, #tpu.memory_space<vmem>>, %arg5: memref<256x256xbf16, #tpu.memory_space<vmem>>, %arg6: memref<256x256xf32, #tpu.memory_space<vmem>>) attributes {dimension_semantics = [#tpu.dimension_semantics<parallel>, #tpu.dimension_semantics<parallel>, #tpu.dimension_semantics<arbitrary>], iteration_bounds = array<i64: 2, 1, 1>, scalar_prefetch = 0 : i64, scratch_operands = 1 : i64, tpu.core_type = #tpu.core_type<tc>, window_params = [{transform_indices = @transform_0, window_bounds = array<i64: 256, 256>}, {transform_indices = @transform_1, window_bounds = array<i64: 256, 256>}, {transform_indices = @transform_2, window_bounds = array<i64: 256, 256>}]} {
    %c0_i32 = arith.constant 0 : i32
    %0 = arith.cmpi eq, %arg2, %c0_i32 : i32
    %1 = arith.extui %0 : i1 to i32
    %c0_i32_0 = arith.constant 0 : i32
    %2 = arith.cmpi ne, %1, %c0_i32_0 : i32
    scf.if %2 {
      %cst_10 = arith.constant 0.000000e+00 : f32
      %12 = vector.broadcast %cst_10 : f32 to vector<256x256xf32>
      %c0_11 = arith.constant 0 : index
      %c0_12 = arith.constant 0 : index
      %13 = vector.load %arg6[%c0_11, %c0_12] : memref<256x256xf32, #tpu.memory_space<vmem>>, vector<256x256xf32>
      tpu.vector_store %arg6[%c0_11, %c0_12], %12 {strides = array<i32>} : memref<256x256xf32, #tpu.memory_space<vmem>>, vector<256x256xf32>,
    } else {
    }
    %c0 = arith.constant 0 : index
    %c0_1 = arith.constant 0 : index
    %3 = vector.load %arg6[%c0, %c0_1] : memref<256x256xf32, #tpu.memory_space<vmem>>, vector<256x256xf32>
    %c0_2 = arith.constant 0 : index
    %c0_3 = arith.constant 0 : index
    %4 = vector.load %arg3[%c0_2, %c0_3] : memref<256x256xbf16, #tpu.memory_space<vmem>>, vector<256x256xbf16>
    %c0_4 = arith.constant 0 : index
    %c0_5 = arith.constant 0 : index
    %5 = vector.load %arg4[%c0_4, %c0_5] : memref<256x256xbf16, #tpu.memory_space<vmem>>, vector<256x256xbf16>
    %cst = arith.constant dense<0.000000e+00> : vector<256x256xf32>
    %6 = tpu.matmul %4, %5, %cst {dimension_numbers = #tpu.dot_dimension_numbers<[1], [0], [0], [1], [0, 0, 1, 1], [], []>} : vector<256x256xbf16>, vector<256x256xbf16>, vector<256x256xf32> -> vector<256x256xf32>
    %7 = arith.addf %3, %6 : vector<256x256xf32>
    %c0_6 = arith.constant 0 : index
    %c0_7 = arith.constant 0 : index
    %8 = vector.load %arg6[%c0_6, %c0_7] : memref<256x256xf32, #tpu.memory_space<vmem>>, vector<256x256xf32>
    tpu.vector_store %arg6[%c0_6, %c0_7], %7 {strides = array<i32>} : memref<256x256xf32, #tpu.memory_space<vmem>>, vector<256x256xf32>,
    %c0_i32_8 = arith.constant 0 : i32
    %9 = arith.cmpi eq, %arg2, %c0_i32_8 : i32
    %10 = arith.extui %9 : i1 to i32
    %c0_i32_9 = arith.constant 0 : i32
    %11 = arith.cmpi ne, %10, %c0_i32_9 : i32
    scf.if %11 {
      %c0_10 = arith.constant 0 : index
      %c0_11 = arith.constant 0 : index
      %12 = vector.load %arg6[%c0_10, %c0_11] : memref<256x256xf32, #tpu.memory_space<vmem>>, vector<256x256xf32>
      %13 = arith.truncf %12 : vector<256x256xf32> to vector<256x256xbf16>
      %c0_12 = arith.constant 0 : index
      %c0_13 = arith.constant 0 : index
      %14 = vector.load %arg5[%c0_12, %c0_13] : memref<256x256xbf16, #tpu.memory_space<vmem>>, vector<256x256xbf16>
      tpu.vector_store %arg5[%c0_12, %c0_13], %13 {strides = array<i32>} : memref<256x256xbf16, #tpu.memory_space<vmem>>, vector<256x256xbf16>,
    } else {
    }
    return
  }
  func.func @transform_0(%arg0: i32, %arg1: i32, %arg2: i32) -> (i32, i32) {
    %c0_i32 = arith.constant 0 : i32
    return %arg0, %arg2 : i32, i32
  }
  func.func @transform_1(%arg0: i32, %arg1: i32, %arg2: i32) -> (i32, i32) {
    %c0_i32 = arith.constant 0 : i32
    return %arg2, %arg1 : i32, i32
  }
  func.func @transform_2(%arg0: i32, %arg1: i32, %arg2: i32) -> (i32, i32) {
    %c0_i32 = arith.constant 0 : i32
    return %arg0, %arg1 : i32, i32
  }
}

</mosaic_0001>

<llo_original>
// kernel: tpu_custom_call.1
$region0: #{tpu_custom_call.1}
  #allocation0 [shape = 'u32[]', space=smem, size = 0x4, offset = 0x4, fixed_abs, tag = 'smem constant byte address 0x4 - core index']
  #allocation1 [shape = 'u32[72,128]{1,0:T(1,128)}', space=vmem, size = 0x9000, scoped, tag = 'internal scratch']
  #allocation2 [shape = 'f32[256,256]{1,0:T(8,128)}', space=vmem, size = 0x40000, scoped, tag = 'scratch operand']
  %s0 = inlined_call_operand.hbm [shape: bf16[512,256], index: 0, kind: input, shape index: {}]
  %s1 = inlined_call_operand.hbm [shape: bf16[256,256], index: 1, kind: input, shape index: {}]
  %s2 = inlined_call_operand.hbm [shape: bf16[512,256], index: 2, kind: output, shape index: {}]
  %s3 = sld [smem:[#allocation0]]
  $region57: #{tpu_custom_call.1} parent=0
    _
  %s5 = ssub.s32 1, %s3
  %s6 = scalar_select 0, %s5, %s3
  $region1: #{tpu_custom_call.1} parent=0
    #allocation3 [shape = 'u8[262144]{0}', space=vmem, size = 0x40000, scoped, tag = 'input window, operand 0']
    #allocation4 [shape = 's32[2]{0}', space=sflag, size = 0x8, scoped, tag = 'scoped memory for tpu_custom_call.1']
    #allocation5 [shape = 's32[2]{0}', space=sflag, size = 0x8, scoped, tag = 'scoped memory for tpu_custom_call.1']
    #allocation6 [shape = 'u8[131072]{0}', space=vmem, size = 0x20000, scoped, tag = 'input window, operand 1, single buffered']
    #allocation7 [shape = 's32[1]{0}', space=sflag, size = 0x4, scoped, tag = 'scoped memory for tpu_custom_call.1']
    #allocation8 [shape = 'u8[262144]{0}', space=vmem, size = 0x40000, scoped, tag = 'output window, operand 0']
    %7 = vsyncpa [#allocation4], 0
    %s8 = scalar_lea.sflag [#allocation4], 1
    %9 = vsyncpa %s8, 0
    %10 = vsyncpa [#allocation7], 0
    %11 = vsyncpa [#allocation5], 0
    %s12 = scalar_lea.sflag [#allocation5], 1
    %13 = vsyncpa %s12, 0
    loop: start=0, step=1, limit=4
    $region2: #{tpu_custom_call.1} parent=1 // loop_pre_header
      _
    $region3: #{tpu_custom_call.1} parent=1 // loop_header
      %s15 = sphi 0, %s19
      %p16 = scmp.ge.s32.totalorder %s15, 4
      %s22 = sphi 0, %s41
      %s23 = sphi 0, %s37
      %s24 = sphi 0, %s33
      %s25 = sphi 0, %s22
      %s26 = sphi 0, %s23
      %s27 = sphi 0, %s24
      %s28 = sphi 0, %s25
      %s29 = sphi 0, %s26
      %s30 = sphi 0, %s27
      %s46 = sphi 0, %s48
      %s49 = sphi 0, %s46
      %s50 = sphi 0, %s49
      %s66 = sphi 0, %s50
      %s74 = sphi 0, %s76
      %s77 = sphi 0, %s74
      %s78 = sphi 0, %s77
      %s94 = sphi 0, %s78
      %s102 = sphi 0, %s104
      %s105 = sphi 0, %s102
      %s106 = sphi 0, %s105
      %s122 = sphi 0, %s106
    $region4: #{tpu_custom_call.1} parent=1 // loop_header_branch
      %18 = sbr.rel (%p16) target = $region8
    $region5: #{tpu_custom_call.1} parent=1 // loop_body
      %s20 = ssub.s32 %s15, 1
      %s21 = ssub.s32 %s15, 2
      %s31 = sadd.s32 1, %s24
      %p32 = scmp.ge.s32.totalorder %s31, 1
      %s33 = scalar_select %p32, 0, %s31
      %s34 = sadd.s32 1, %s23
      %s35 = scalar_select %p32, %s34, %s23
      %p36 = scmp.ge.s32.totalorder %s35, 1
      %s37 = scalar_select %p36, 0, %s35
      %s38 = sadd.s32 1, %s22
      %s39 = scalar_select %p36, %s38, %s22
      %p40 = scmp.ge.s32.totalorder %s39, 2
      %s41 = scalar_select %p40, 0, %s39
      %s42 = ssub.s32 %s22, %s41
      %s43 = ssub.s32 %s24, %s33
      %s44 = sor.u32 %s42, %s43
      %p45 = scmp.eq.s32.totalorder %s44, 0
      %s47 = sadd.s32 %s46, 1
      %s48 = scalar_select %p45, %s46, %s47
      %p51 = pneg %p45
      %p52 = scmp.eq.s32.totalorder %s15, 1
      %p53 = por %p51, %p52
      %p54 = scmp.ne.s32.totalorder %s46, %s49
      %p55 = scmp.eq.s32.totalorder %s15, 0
      %p56 = por %p54, %p55
      %p57 = scmp.ne.s32.totalorder %s46, %s49
      %p58 = scmp.eq.s32.totalorder %s20, 1
      %p59 = por %p57, %p58
      %p60 = scmp.ne.s32.totalorder %s49, %s50
      %p61 = scmp.eq.s32.totalorder %s20, 0
      %p62 = por %p60, %p61
      %p63 = scmp.ne.s32.totalorder %s49, %s50
      %p64 = scmp.eq.s32.totalorder %s21, 1
      %p65 = por %p63, %p64
      %p67 = scmp.ne.s32.totalorder %s50, %s66
      %p68 = scmp.eq.s32.totalorder %s21, 0
      %p69 = por %p67, %p68
      %s70 = ssub.s32 %s24, %s33
      %s71 = ssub.s32 %s23, %s37
      %s72 = sor.u32 %s70, %s71
      %p73 = scmp.eq.s32.totalorder %s72, 0
      %s75 = sadd.s32 %s74, 1
      %s76 = scalar_select %p73, %s74, %s75
      %p79 = pneg %p73
      %p80 = scmp.eq.s32.totalorder %s15, 1
      %p81 = por %p79, %p80
      %p82 = scmp.ne.s32.totalorder %s74, %s77
      %p83 = scmp.eq.s32.totalorder %s15, 0
      %p84 = por %p82, %p83
      %p85 = scmp.ne.s32.totalorder %s74, %s77
      %p86 = scmp.eq.s32.totalorder %s20, 1
      %p87 = por %p85, %p86
      %p88 = scmp.ne.s32.totalorder %s77, %s78
      %p89 = scmp.eq.s32.totalorder %s20, 0
      %p90 = por %p88, %p89
      %p91 = scmp.ne.s32.totalorder %s77, %s78
      %p92 = scmp.eq.s32.totalorder %s21, 1
      %p93 = por %p91, %p92
      %p95 = scmp.ne.s32.totalorder %s78, %s94
      %p96 = scmp.eq.s32.totalorder %s21, 0
      %p97 = por %p95, %p96
      %s98 = ssub.s32 %s22, %s41
      %s99 = ssub.s32 %s23, %s37
      %s100 = sor.u32 %s98, %s99
      %p101 = scmp.eq.s32.totalorder %s100, 0
      %s103 = sadd.s32 %s102, 1
      %s104 = scalar_select %p101, %s102, %s103
      %p107 = pneg %p101
      %p108 = scmp.eq.s32.totalorder %s15, 1
      %p109 = por %p107, %p108
      %p110 = scmp.ne.s32.totalorder %s102, %s105
      %p111 = scmp.eq.s32.totalorder %s15, 0
      %p112 = por %p110, %p111
      %p113 = scmp.ne.s32.totalorder %s102, %s105
      %p114 = scmp.eq.s32.totalorder %s20, 1
      %p115 = por %p113, %p114
      %p116 = scmp.ne.s32.totalorder %s105, %s106
      %p117 = scmp.eq.s32.totalorder %s20, 0
      %p118 = por %p116, %p117
      %p119 = scmp.ne.s32.totalorder %s105, %s106
      %p120 = scmp.eq.s32.totalorder %s21, 1
      %p121 = por %p119, %p120
      %p123 = scmp.ne.s32.totalorder %s106, %s122
      %p124 = scmp.eq.s32.totalorder %s21, 0
      %p125 = por %p123, %p124
      %p126 = scmp.le.s32.totalorder 1, %s15
      %p127 = scmp.lt.s32.totalorder %s15, 3
      %p128 = pnand %p126, %p127
      %p129 = pneg %p128
      // Predicated region
      $region9: #{tpu_custom_call.1} parent=5 // pred_check
        _
      $region10: #{tpu_custom_call.1} parent=5 // pred_check_branch
        %131 = sbr.rel (%p128) target = $region12
      $region11: #{tpu_custom_call.1} parent=5 // pred_region
        %s132 = ssub.s32 %s15, 1
        // Predicated region
        $region13: #{tpu_custom_call.1} parent=11 // pred_check
          %p133 = pneg %p90
        $region14: #{tpu_custom_call.1} parent=11 // pred_check_branch
          %135 = sbr.rel (%p133) target = $region16
        $region15: #{tpu_custom_call.1} parent=11 // pred_region
          %s136 = smul.u32 32, %s27
          %s137 = smul.u32 2, %s26
          %139 = vsyncadd [#allocation7], 0
          %s140 = smul.addr %s136, 2
          %s141 = sadd.s32 %s137, %s140
          %s142 = smul.addr %s141, 4
          %s143 = scalar_lea.hbm %s1, %s142
          %s144 = sshll.u32 %s143, 4
          %s145 = int_to_ptr.hbm [resolvable:$true] %s144
          %s146 = sshll.u32 [#allocation6], 4
          %s147 = int_to_ptr.vmem [resolvable:$true] %s146
          %152 = dma.hbm_to_vmem [thread:$0]  %s145, 4096, %s147, [#allocation7], 128, 128, 8
        $region16: #{tpu_custom_call.1} parent=11 // pred_fallthru
          _
      $region12: #{tpu_custom_call.1} parent=5 // pred_fallthru
        _
      %p153 = scmp.lt.s32.totalorder %s15, 2
      // Predicated region
      $region17: #{tpu_custom_call.1} parent=5 // pred_check
        %p154 = pneg %p153
      $region18: #{tpu_custom_call.1} parent=5 // pred_check_branch
        %156 = sbr.rel (%p154) target = $region20
      $region19: #{tpu_custom_call.1} parent=5 // pred_region
        // Predicated region
        $region21: #{tpu_custom_call.1} parent=19 // pred_check
          %p157 = pneg %p56
        $region22: #{tpu_custom_call.1} parent=19 // pred_check_branch
          %159 = sbr.rel (%p157) target = $region24
        $region23: #{tpu_custom_call.1} parent=19 // pred_region
          %s160 = sand.u32 %s46, 1
          %s161 = scalar_lea.sflag [#allocation4], %s160
          %s162 = sand.u32 %s46, 1
          %s163 = smul.addr %s162, 256
          %s164 = scalar_lea.vmem [#allocation3], %s163
          %s165 = smul.u32 32, %s22
          %s166 = smul.u32 2, %s24
          %168 = vsyncadd %s161, 0
          %s169 = smul.addr %s165, 2
          %s170 = sadd.s32 %s166, %s169
          %s171 = smul.addr %s170, 4
          %s172 = scalar_lea.hbm %s0, %s171
          %s173 = sshll.u32 %s172, 4
          %s174 = int_to_ptr.hbm [resolvable:$true] %s173
          %s175 = sshll.u32 %s164, 4
          %s176 = int_to_ptr.vmem [resolvable:$true] %s175
          %181 = dma.hbm_to_vmem [thread:$0]  %s174, 4096, %s176, %s161, 128, 128, 8
        $region24: #{tpu_custom_call.1} parent=19 // pred_fallthru
          _
      $region20: #{tpu_custom_call.1} parent=5 // pred_fallthru
        _
      %p182 = scmp.le.s32.totalorder 1, %s15
      %p183 = scmp.lt.s32.totalorder %s15, 3
      %p184 = pnand %p182, %p183
      %p185 = pneg %p184
      // Predicated region
      $region25: #{tpu_custom_call.1} parent=5 // pred_check
        _
      $region26: #{tpu_custom_call.1} parent=5 // pred_check_branch
        %187 = sbr.rel (%p184) target = $region28
      $region27: #{tpu_custom_call.1} parent=5 // pred_region
        %s188 = ssub.s32 %s15, 1
        %s189 = sand.u32 %s49, 1
        %s190 = scalar_lea.sflag [#allocation4], %s189
        %s191 = sand.u32 %s49, 1
        %s192 = smul.addr %s191, 256
        %s193 = scalar_lea.vmem [#allocation3], %s192
        // Predicated region
        $region29: #{tpu_custom_call.1} parent=27 // pred_check
          %p194 = pneg %p62
        $region30: #{tpu_custom_call.1} parent=27 // pred_check_branch
          %196 = sbr.rel (%p194) target = $region32
        $region31: #{tpu_custom_call.1} parent=27 // pred_region
          %198 = dma.done %s190, 4096
        $region32: #{tpu_custom_call.1} parent=27 // pred_fallthru
          _
        // Predicated region
        $region33: #{tpu_custom_call.1} parent=27 // pred_check
          %p199 = pneg %p90
        $region34: #{tpu_custom_call.1} parent=27 // pred_check_branch
          %201 = sbr.rel (%p199) target = $region36
        $region35: #{tpu_custom_call.1} parent=27 // pred_region
          %203 = dma.done [#allocation7], 4096
        $region36: #{tpu_custom_call.1} parent=27 // pred_fallthru
          _
        %s204 = sand.u32 %s49, 1
        %s205 = scalar_lea.sflag [#allocation4], %s204
        %s206 = sand.u32 %s49, 1
        %s207 = smul.addr %s206, 256
        %s208 = scalar_lea.vmem [#allocation3], %s207
        %p209 = pneg %p62
        %p210 = pneg %p59
        %p211 = pneg %p90
        %p212 = pneg %p87
        %p213 = pneg %p118
        %p214 = pneg %p115
        %s215 = sand.u32 %s105, 1
        %s216 = scalar_lea.sflag [#allocation5], %s215
        %s217 = sand.u32 %s105, 1
        %s218 = smul.addr %s217, 256
        %s219 = scalar_lea.vmem [#allocation8], %s218
        %s220 = smul.u32 32, %s25
        %s221 = smul.u32 2, %s27
        %s222 = smul.u32 32, %s27
        %s223 = smul.u32 2, %s26
        %s224 = smul.u32 32, %s25
        %s225 = smul.u32 2, %s26
        %p226 = scmp.eq.s32.totalorder %s27, 0
        // Predicated region
        $region37: #{tpu_custom_call.1} parent=27 // pred_check
          %p227 = pneg %p226
        $region38: #{tpu_custom_call.1} parent=27 // pred_check_branch
          %229 = sbr.rel (%p227) target = $region40
        $region39: #{tpu_custom_call.1} parent=27 // pred_region
          %230 = vst [vmem:[#allocation2] sm:$0xff] 0.0
          %231 = vst [vmem:[#allocation2 + $0x8] sm:$0xff] 0.0
          %232 = vst [vmem:[#allocation2 + $0x10] sm:$0xff] 0.0
          %233 = vst [vmem:[#allocation2 + $0x18] sm:$0xff] 0.0
          %234 = vst [vmem:[#allocation2 + $0x20] sm:$0xff] 0.0
          %235 = vst [vmem:[#allocation2 + $0x28] sm:$0xff] 0.0
          %236 = vst [vmem:[#allocation2 + $0x30] sm:$0xff] 0.0
          %237 = vst [vmem:[#allocation2 + $0x38] sm:$0xff] 0.0
          %238 = vst [vmem:[#allocation2 + $0x40] sm:$0xff] 0.0
          %239 = vst [vmem:[#allocation2 + $0x48] sm:$0xff] 0.0
          %240 = vst [vmem:[#allocation2 + $0x50] sm:$0xff] 0.0
          %241 = vst [vmem:[#allocation2 + $0x58] sm:$0xff] 0.0
          %242 = vst [vmem:[#allocation2 + $0x60] sm:$0xff] 0.0
          %243 = vst [vmem:[#allocation2 + $0x68] sm:$0xff] 0.0
          %244 = vst [vmem:[#allocation2 + $0x70] sm:$0xff] 0.0
          %245 = vst [vmem:[#allocation2 + $0x78] sm:$0xff] 0.0
          %246 = vst [vmem:[#allocation2 + $0x80] sm:$0xff] 0.0
          %247 = vst [vmem:[#allocation2 + $0x88] sm:$0xff] 0.0
          %248 = vst [vmem:[#allocation2 + $0x90] sm:$0xff] 0.0
          %249 = vst [vmem:[#allocation2 + $0x98] sm:$0xff] 0.0
          %250 = vst [vmem:[#allocation2 + $0xa0] sm:$0xff] 0.0
          %251 = vst [vmem:[#allocation2 + $0xa8] sm:$0xff] 0.0
          %252 = vst [vmem:[#allocation2 + $0xb0] sm:$0xff] 0.0
          %253 = vst [vmem:[#allocation2 + $0xb8] sm:$0xff] 0.0
          %254 = vst [vmem:[#allocation2 + $0xc0] sm:$0xff] 0.0
          %255 = vst [vmem:[#allocation2 + $0xc8] sm:$0xff] 0.0
          %256 = vst [vmem:[#allocation2 + $0xd0] sm:$0xff] 0.0
          %257 = vst [vmem:[#allocation2 + $0xd8] sm:$0xff] 0.0
          %258 = vst [vmem:[#allocation2 + $0xe0] sm:$0xff] 0.0
          %259 = vst [vmem:[#allocation2 + $0xe8] sm:$0xff] 0.0
          %260 = vst [vmem:[#allocation2 + $0xf0] sm:$0xff] 0.0
          %261 = vst [vmem:[#allocation2 + $0xf8] sm:$0xff] 0.0
          %262 = vst [vmem:[#allocation2 + $0x100] sm:$0xff] 0.0
          %263 = vst [vmem:[#allocation2 + $0x108] sm:$0xff] 0.0
          %264 = vst [vmem:[#allocation2 + $0x110] sm:$0xff] 0.0
          %265 = vst [vmem:[#allocation2 + $0x118] sm:$0xff] 0.0
          %266 = vst [vmem:[#allocation2 + $0x120] sm:$0xff] 0.0
          %267 = vst [vmem:[#allocation2 + $0x128] sm:$0xff] 0.0
          %268 = vst [vmem:[#allocation2 + $0x130] sm:$0xff] 0.0
          %269 = vst [vmem:[#allocation2 + $0x138] sm:$0xff] 0.0
          %270 = vst [vmem:[#allocation2 + $0x140] sm:$0xff] 0.0
          %271 = vst [vmem:[#allocation2 + $0x148] sm:$0xff] 0.0
          %272 = vst [vmem:[#allocation2 + $0x150] sm:$0xff] 0.0
          %273 = vst [vmem:[#allocation2 + $0x158] sm:$0xff] 0.0
          %274 = vst [vmem:[#allocation2 + $0x160] sm:$0xff] 0.0
          %275 = vst [vmem:[#allocation2 + $0x168] sm:$0xff] 0.0
          %276 = vst [vmem:[#allocation2 + $0x170] sm:$0xff] 0.0
          %277 = vst [vmem:[#allocation2 + $0x178] sm:$0xff] 0.0
          %278 = vst [vmem:[#allocation2 + $0x180] sm:$0xff] 0.0
          %279 = vst [vmem:[#allocation2 + $0x188] sm:$0xff] 0.0
          %280 = vst [vmem:[#allocation2 + $0x190] sm:$0xff] 0.0
          %281 = vst [vmem:[#allocation2 + $0x198] sm:$0xff] 0.0
          %282 = vst [vmem:[#allocation2 + $0x1a0] sm:$0xff] 0.0
          %283 = vst [vmem:[#allocation2 + $0x1a8] sm:$0xff] 0.0
          %284 = vst [vmem:[#allocation2 + $0x1b0] sm:$0xff] 0.0
          %285 = vst [vmem:[#allocation2 + $0x1b8] sm:$0xff] 0.0
          %286 = vst [vmem:[#allocation2 + $0x1c0] sm:$0xff] 0.0
          %287 = vst [vmem:[#allocation2 + $0x1c8] sm:$0xff] 0.0
          %288 = vst [vmem:[#allocation2 + $0x1d0] sm:$0xff] 0.0
          %289 = vst [vmem:[#allocation2 + $0x1d8] sm:$0xff] 0.0
          %290 = vst [vmem:[#allocation2 + $0x1e0] sm:$0xff] 0.0
          %291 = vst [vmem:[#allocation2 + $0x1e8] sm:$0xff] 0.0
          %292 = vst [vmem:[#allocation2 + $0x1f0] sm:$0xff] 0.0
          %293 = vst [vmem:[#allocation2 + $0x1f8] sm:$0xff] 0.0
        $region40: #{tpu_custom_call.1} parent=27 // pred_fallthru
          _
        %v294 = vld [vmem:[#allocation2] sm:$0xff]
        %v295 = vld [vmem:[#allocation2 + $0x8] sm:$0xff]
        %v296 = vld [vmem:[#allocation2 + $0x10] sm:$0xff]
        %v297 = vld [vmem:[#allocation2 + $0x18] sm:$0xff]
        %v298 = vld [vmem:[#allocation2 + $0x20] sm:$0xff]
        %v299 = vld [vmem:[#allocation2 + $0x28] sm:$0xff]
        %v300 = vld [vmem:[#allocation2 + $0x30] sm:$0xff]
        %v301 = vld [vmem:[#allocation2 + $0x38] sm:$0xff]
        %v302 = vld [vmem:[#allocation2 + $0x40] sm:$0xff]
        %v303 = vld [vmem:[#allocation2 + $0x48] sm:$0xff]
        %v304 = vld [vmem:[#allocation2 + $0x50] sm:$0xff]
        %v305 = vld [vmem:[#allocation2 + $0x58] sm:$0xff]
        %v306 = vld [vmem:[#allocation2 + $0x60] sm:$0xff]
        %v307 = vld [vmem:[#allocation2 + $0x68] sm:$0xff]
        %v308 = vld [vmem:[#allocation2 + $0x70] sm:$0xff]
        %v309 = vld [vmem:[#allocation2 + $0x78] sm:$0xff]
        %v310 = vld [vmem:[#allocation2 + $0x80] sm:$0xff]
        %v311 = vld [vmem:[#allocation2 + $0x88] sm:$0xff]
        %v312 = vld [vmem:[#allocation2 + $0x90] sm:$0xff]
        %v313 = vld [vmem:[#allocation2 + $0x98] sm:$0xff]
        %v314 = vld [vmem:[#allocation2 + $0xa0] sm:$0xff]
        %v315 = vld [vmem:[#allocation2 + $0xa8] sm:$0xff]
        %v316 = vld [vmem:[#allocation2 + $0xb0] sm:$0xff]
        %v317 = vld [vmem:[#allocation2 + $0xb8] sm:$0xff]
        %v318 = vld [vmem:[#allocation2 + $0xc0] sm:$0xff]
        %v319 = vld [vmem:[#allocation2 + $0xc8] sm:$0xff]
        %v320 = vld [vmem:[#allocation2 + $0xd0] sm:$0xff]
        %v321 = vld [vmem:[#allocation2 + $0xd8] sm:$0xff]
        %v322 = vld [vmem:[#allocation2 + $0xe0] sm:$0xff]
        %v323 = vld [vmem:[#allocation2 + $0xe8] sm:$0xff]
        %v324 = vld [vmem:[#allocation2 + $0xf0] sm:$0xff]
        %v325 = vld [vmem:[#allocation2 + $0xf8] sm:$0xff]
        %v326 = vld [vmem:[#allocation2 + $0x100] sm:$0xff]
        %v327 = vld [vmem:[#allocation2 + $0x108] sm:$0xff]
        %v328 = vld [vmem:[#allocation2 + $0x110] sm:$0xff]
        %v329 = vld [vmem:[#allocation2 + $0x118] sm:$0xff]
        %v330 = vld [vmem:[#allocation2 + $0x120] sm:$0xff]
        %v331 = vld [vmem:[#allocation2 + $0x128] sm:$0xff]
        %v332 = vld [vmem:[#allocation2 + $0x130] sm:$0xff]
        %v333 = vld [vmem:[#allocation2 + $0x138] sm:$0xff]
        %v334 = vld [vmem:[#allocation2 + $0x140] sm:$0xff]
        %v335 = vld [vmem:[#allocation2 + $0x148] sm:$0xff]
        %v336 = vld [vmem:[#allocation2 + $0x150] sm:$0xff]
        %v337 = vld [vmem:[#allocation2 + $0x158] sm:$0xff]
        %v338 = vld [vmem:[#allocation2 + $0x160] sm:$0xff]
        %v339 = vld [vmem:[#allocation2 + $0x168] sm:$0xff]
        %v340 = vld [vmem:[#allocation2 + $0x170] sm:$0xff]
        %v341 = vld [vmem:[#allocation2 + $0x178] sm:$0xff]
        %v342 = vld [vmem:[#allocation2 + $0x180] sm:$0xff]
        %v343 = vld [vmem:[#allocation2 + $0x188] sm:$0xff]
        %v344 = vld [vmem:[#allocation2 + $0x190] sm:$0xff]
        %v345 = vld [vmem:[#allocation2 + $0x198] sm:$0xff]
        %v346 = vld [vmem:[#allocation2 + $0x1a0] sm:$0xff]
        %v347 = vld [vmem:[#allocation2 + $0x1a8] sm:$0xff]
        %v348 = vld [vmem:[#allocation2 + $0x1b0] sm:$0xff]
        %v349 = vld [vmem:[#allocation2 + $0x1b8] sm:$0xff]
        %v350 = vld [vmem:[#allocation2 + $0x1c0] sm:$0xff]
        %v351 = vld [vmem:[#allocation2 + $0x1c8] sm:$0xff]
        %v352 = vld [vmem:[#allocation2 + $0x1d0] sm:$0xff]
        %v353 = vld [vmem:[#allocation2 + $0x1d8] sm:$0xff]
        %v354 = vld [vmem:[#allocation2 + $0x1e0] sm:$0xff]
        %v355 = vld [vmem:[#allocation2 + $0x1e8] sm:$0xff]
        %v356 = vld [vmem:[#allocation2 + $0x1f0] sm:$0xff]
        %v357 = vld [vmem:[#allocation2 + $0x1f8] sm:$0xff]
        %v358 = vld [vmem:[%s193] sm:$0xff]
        %v359 = vld [vmem:[%s193 + $0x8] sm:$0xff]
        %v360 = vld [vmem:[%s193 + $0x10] sm:$0xff]
        %v361 = vld [vmem:[%s193 + $0x18] sm:$0xff]
        %v362 = vld [vmem:[%s193 + $0x20] sm:$0xff]
        %v363 = vld [vmem:[%s193 + $0x28] sm:$0xff]
        %v364 = vld [vmem:[%s193 + $0x30] sm:$0xff]
        %v365 = vld [vmem:[%s193 + $0x38] sm:$0xff]
        %v366 = vld [vmem:[%s193 + $0x40] sm:$0xff]
        %v367 = vld [vmem:[%s193 + $0x48] sm:$0xff]
        %v368 = vld [vmem:[%s193 + $0x50] sm:$0xff]
        %v369 = vld [vmem:[%s193 + $0x58] sm:$0xff]
        %v370 = vld [vmem:[%s193 + $0x60] sm:$0xff]
        %v371 = vld [vmem:[%s193 + $0x68] sm:$0xff]
        %v372 = vld [vmem:[%s193 + $0x70] sm:$0xff]
        %v373 = vld [vmem:[%s193 + $0x78] sm:$0xff]
        %v374 = vld [vmem:[%s193 + $0x80] sm:$0xff]
        %v375 = vld [vmem:[%s193 + $0x88] sm:$0xff]
        %v376 = vld [vmem:[%s193 + $0x90] sm:$0xff]
        %v377 = vld [vmem:[%s193 + $0x98] sm:$0xff]
        %v378 = vld [vmem:[%s193 + $0xa0] sm:$0xff]
        %v379 = vld [vmem:[%s193 + $0xa8] sm:$0xff]
        %v380 = vld [vmem:[%s193 + $0xb0] sm:$0xff]
        %v381 = vld [vmem:[%s193 + $0xb8] sm:$0xff]
        %v382 = vld [vmem:[%s193 + $0xc0] sm:$0xff]
        %v383 = vld [vmem:[%s193 + $0xc8] sm:$0xff]
        %v384 = vld [vmem:[%s193 + $0xd0] sm:$0xff]
        %v385 = vld [vmem:[%s193 + $0xd8] sm:$0xff]
        %v386 = vld [vmem:[%s193 + $0xe0] sm:$0xff]
        %v387 = vld [vmem:[%s193 + $0xe8] sm:$0xff]
        %v388 = vld [vmem:[%s193 + $0xf0] sm:$0xff]
        %v389 = vld [vmem:[%s193 + $0xf8] sm:$0xff]
        %v390 = vld [vmem:[#allocation6] sm:$0xff]
        %v391 = vld [vmem:[#allocation6 + $0x8] sm:$0xff]
        %v392 = vld [vmem:[#allocation6 + $0x10] sm:$0xff]
        %v393 = vld [vmem:[#allocation6 + $0x18] sm:$0xff]
        %v394 = vld [vmem:[#allocation6 + $0x20] sm:$0xff]
        %v395 = vld [vmem:[#allocation6 + $0x28] sm:$0xff]
        %v396 = vld [vmem:[#allocation6 + $0x30] sm:$0xff]
        %v397 = vld [vmem:[#allocation6 + $0x38] sm:$0xff]
        %v398 = vld [vmem:[#allocation6 + $0x40] sm:$0xff]
        %v399 = vld [vmem:[#allocation6 + $0x48] sm:$0xff]
        %v400 = vld [vmem:[#allocation6 + $0x50] sm:$0xff]
        %v401 = vld [vmem:[#allocation6 + $0x58] sm:$0xff]
        %v402 = vld [vmem:[#allocation6 + $0x60] sm:$0xff]
        %v403 = vld [vmem:[#allocation6 + $0x68] sm:$0xff]
        %v404 = vld [vmem:[#allocation6 + $0x70] sm:$0xff]
        %v405 = vld [vmem:[#allocation6 + $0x78] sm:$0xff]
        %v406 = vld [vmem:[#allocation6 + $0x80] sm:$0xff]
        %v407 = vld [vmem:[#allocation6 + $0x88] sm:$0xff]
        %v408 = vld [vmem:[#allocation6 + $0x90] sm:$0xff]
        %v409 = vld [vmem:[#allocation6 + $0x98] sm:$0xff]
        %v410 = vld [vmem:[#allocation6 + $0xa0] sm:$0xff]
        %v411 = vld [vmem:[#allocation6 + $0xa8] sm:$0xff]
        %v412 = vld [vmem:[#allocation6 + $0xb0] sm:$0xff]
        %v413 = vld [vmem:[#allocation6 + $0xb8] sm:$0xff]
        %v414 = vld [vmem:[#allocation6 + $0xc0] sm:$0xff]
        %v415 = vld [vmem:[#allocation6 + $0xc8] sm:$0xff]
        %v416 = vld [vmem:[#allocation6 + $0xd0] sm:$0xff]
        %v417 = vld [vmem:[#allocation6 + $0xd8] sm:$0xff]
        %v418 = vld [vmem:[#allocation6 + $0xe0] sm:$0xff]
        %v419 = vld [vmem:[#allocation6 + $0xe8] sm:$0xff]
        %v420 = vld [vmem:[#allocation6 + $0xf0] sm:$0xff]
        %v421 = vld [vmem:[#allocation6 + $0xf8] sm:$0xff]
        %v454 = vunpack.c.l.b16 %v358
        %v455 = vunpack.c.h.b16 %v358
        %v456 = vunpack.c.l.b16 %v359
        %v457 = vunpack.c.h.b16 %v359
        %v458 = vunpack.c.l.b16 %v360
        %v459 = vunpack.c.h.b16 %v360
        %v460 = vunpack.c.l.b16 %v361
        %v461 = vunpack.c.h.b16 %v361
        %v462 = vunpack.c.l.b16 %v362
        %v463 = vunpack.c.h.b16 %v362
        %v464 = vunpack.c.l.b16 %v363
        %v465 = vunpack.c.h.b16 %v363
        %v466 = vunpack.c.l.b16 %v364
        %v467 = vunpack.c.h.b16 %v364
        %v468 = vunpack.c.l.b16 %v365
        %v469 = vunpack.c.h.b16 %v365
        %v470 = vunpack.c.l.b16 %v366
        %v471 = vunpack.c.h.b16 %v366
        %v472 = vunpack.c.l.b16 %v367
        %v473 = vunpack.c.h.b16 %v367
        %v474 = vunpack.c.l.b16 %v368
        %v475 = vunpack.c.h.b16 %v368
        %v476 = vunpack.c.l.b16 %v369
        %v477 = vunpack.c.h.b16 %v369
        %v478 = vunpack.c.l.b16 %v370
        %v479 = vunpack.c.h.b16 %v370
        %v480 = vunpack.c.l.b16 %v371
        %v481 = vunpack.c.h.b16 %v371
        %v482 = vunpack.c.l.b16 %v372
        %v483 = vunpack.c.h.b16 %v372
        %v484 = vunpack.c.l.b16 %v373
        %v485 = vunpack.c.h.b16 %v373
        %v486 = vunpack.c.l.b16 %v374
        %v487 = vunpack.c.h.b16 %v374
        %v488 = vunpack.c.l.b16 %v375
        %v489 = vunpack.c.h.b16 %v375
        %v490 = vunpack.c.l.b16 %v376
        %v491 = vunpack.c.h.b16 %v376
        %v492 = vunpack.c.l.b16 %v377
        %v493 = vunpack.c.h.b16 %v377
        %v494 = vunpack.c.l.b16 %v378
        %v495 = vunpack.c.h.b16 %v378
        %v496 = vunpack.c.l.b16 %v379
        %v497 = vunpack.c.h.b16 %v379
        %v498 = vunpack.c.l.b16 %v380
        %v499 = vunpack.c.h.b16 %v380
        %v500 = vunpack.c.l.b16 %v381
        %v501 = vunpack.c.h.b16 %v381
        %v502 = vunpack.c.l.b16 %v382
        %v503 = vunpack.c.h.b16 %v382
        %v504 = vunpack.c.l.b16 %v383
        %v505 = vunpack.c.h.b16 %v383
        %v506 = vunpack.c.l.b16 %v384
        %v507 = vunpack.c.h.b16 %v384
        %v508 = vunpack.c.l.b16 %v385
        %v509 = vunpack.c.h.b16 %v385
        %v510 = vunpack.c.l.b16 %v386
        %v511 = vunpack.c.h.b16 %v386
        %v512 = vunpack.c.l.b16 %v387
        %v513 = vunpack.c.h.b16 %v387
        %v514 = vunpack.c.l.b16 %v388
        %v515 = vunpack.c.h.b16 %v388
        %v516 = vunpack.c.l.b16 %v389
        %v517 = vunpack.c.h.b16 %v389
        %v518 = vpack.c.b16 %v456, %v454
        %v519 = vpack.c.b16 %v457, %v455
        %v520 = vpack.c.b16 %v460, %v458
        %v521 = vpack.c.b16 %v461, %v459
        %v522 = vpack.c.b16 %v464, %v462
        %v523 = vpack.c.b16 %v465, %v463
        %v524 = vpack.c.b16 %v468, %v466
        %v525 = vpack.c.b16 %v469, %v467
        %v526 = vpack.c.b16 %v472, %v470
        %v527 = vpack.c.b16 %v473, %v471
        %v528 = vpack.c.b16 %v476, %v474
        %v529 = vpack.c.b16 %v477, %v475
        %v530 = vpack.c.b16 %v480, %v478
        %v531 = vpack.c.b16 %v481, %v479
        %v532 = vpack.c.b16 %v484, %v482
        %v533 = vpack.c.b16 %v485, %v483
        %v534 = vpack.c.b16 %v488, %v486
        %v535 = vpack.c.b16 %v489, %v487
        %v536 = vpack.c.b16 %v492, %v490
        %v537 = vpack.c.b16 %v493, %v491
        %v538 = vpack.c.b16 %v496, %v494
        %v539 = vpack.c.b16 %v497, %v495
        %v540 = vpack.c.b16 %v500, %v498
        %v541 = vpack.c.b16 %v501, %v499
        %v542 = vpack.c.b16 %v504, %v502
        %v543 = vpack.c.b16 %v505, %v503
        %v544 = vpack.c.b16 %v508, %v506
        %v545 = vpack.c.b16 %v509, %v507
        %v546 = vpack.c.b16 %v512, %v510
        %v547 = vpack.c.b16 %v513, %v511
        %v548 = vpack.c.b16 %v516, %v514
        %v549 = vpack.c.b16 %v517, %v515
        %v614 = vunpack.c.l.b16 %v390
        %v615 = vunpack.c.h.b16 %v390
        %v616 = vunpack.c.l.b16 %v391
        %v617 = vunpack.c.h.b16 %v391
        %v618 = vunpack.c.l.b16 %v392
        %v619 = vunpack.c.h.b16 %v392
        %v620 = vunpack.c.l.b16 %v393
        %v621 = vunpack.c.h.b16 %v393
        %v622 = vunpack.c.l.b16 %v394
        %v623 = vunpack.c.h.b16 %v394
        %v624 = vunpack.c.l.b16 %v395
        %v625 = vunpack.c.h.b16 %v395
        %v626 = vunpack.c.l.b16 %v396
        %v627 = vunpack.c.h.b16 %v396
        %v628 = vunpack.c.l.b16 %v397
        %v629 = vunpack.c.h.b16 %v397
        %v630 = vunpack.c.l.b16 %v398
        %v631 = vunpack.c.h.b16 %v398
        %v632 = vunpack.c.l.b16 %v399
        %v633 = vunpack.c.h.b16 %v399
        %v634 = vunpack.c.l.b16 %v400
        %v635 = vunpack.c.h.b16 %v400
        %v636 = vunpack.c.l.b16 %v401
        %v637 = vunpack.c.h.b16 %v401
        %v638 = vunpack.c.l.b16 %v402
        %v639 = vunpack.c.h.b16 %v402
        %v640 = vunpack.c.l.b16 %v403
        %v641 = vunpack.c.h.b16 %v403
        %v642 = vunpack.c.l.b16 %v404
        %v643 = vunpack.c.h.b16 %v404
        %v644 = vunpack.c.l.b16 %v405
        %v645 = vunpack.c.h.b16 %v405
        %v646 = vunpack.c.l.b16 %v406
        %v647 = vunpack.c.h.b16 %v406
        %v648 = vunpack.c.l.b16 %v407
        %v649 = vunpack.c.h.b16 %v407
        %v650 = vunpack.c.l.b16 %v408
        %v651 = vunpack.c.h.b16 %v408
        %v652 = vunpack.c.l.b16 %v409
        %v653 = vunpack.c.h.b16 %v409
        %v654 = vunpack.c.l.b16 %v410
        %v655 = vunpack.c.h.b16 %v410
        %v656 = vunpack.c.l.b16 %v411
        %v657 = vunpack.c.h.b16 %v411
        %v658 = vunpack.c.l.b16 %v412
        %v659 = vunpack.c.h.b16 %v412
        %v660 = vunpack.c.l.b16 %v413
        %v661 = vunpack.c.h.b16 %v413
        %v662 = vunpack.c.l.b16 %v414
        %v663 = vunpack.c.h.b16 %v414
        %v664 = vunpack.c.l.b16 %v415
        %v665 = vunpack.c.h.b16 %v415
        %v666 = vunpack.c.l.b16 %v416
        %v667 = vunpack.c.h.b16 %v416
        %v668 = vunpack.c.l.b16 %v417
        %v669 = vunpack.c.h.b16 %v417
        %v670 = vunpack.c.l.b16 %v418
        %v671 = vunpack.c.h.b16 %v418
        %v672 = vunpack.c.l.b16 %v419
        %v673 = vunpack.c.h.b16 %v419
        %v674 = vunpack.c.l.b16 %v420
        %v675 = vunpack.c.h.b16 %v420
        %v676 = vunpack.c.l.b16 %v421
        %v677 = vunpack.c.h.b16 %v421
        %v678 = vpack.c.b16 %v616, %v614
        %v679 = vpack.c.b16 %v617, %v615
        %v680 = vpack.c.b16 %v620, %v618
        %v681 = vpack.c.b16 %v621, %v619
        %v682 = vpack.c.b16 %v624, %v622
        %v683 = vpack.c.b16 %v625, %v623
        %v684 = vpack.c.b16 %v628, %v626
        %v685 = vpack.c.b16 %v629, %v627
        %v686 = vpack.c.b16 %v632, %v630
        %v687 = vpack.c.b16 %v633, %v631
        %v688 = vpack.c.b16 %v636, %v634
        %v689 = vpack.c.b16 %v637, %v635
        %v690 = vpack.c.b16 %v640, %v638
        %v691 = vpack.c.b16 %v641, %v639
        %v692 = vpack.c.b16 %v644, %v642
        %v693 = vpack.c.b16 %v645, %v643
        %v694 = vpack.c.b16 %v648, %v646
        %v695 = vpack.c.b16 %v649, %v647
        %v696 = vpack.c.b16 %v652, %v650
        %v697 = vpack.c.b16 %v653, %v651
        %v698 = vpack.c.b16 %v656, %v654
        %v699 = vpack.c.b16 %v657, %v655
        %v700 = vpack.c.b16 %v660, %v658
        %v701 = vpack.c.b16 %v661, %v659
        %v702 = vpack.c.b16 %v664, %v662
        %v703 = vpack.c.b16 %v665, %v663
        %v704 = vpack.c.b16 %v668, %v666
        %v705 = vpack.c.b16 %v669, %v667
        %v706 = vpack.c.b16 %v672, %v670
        %v707 = vpack.c.b16 %v673, %v671
        %v708 = vpack.c.b16 %v676, %v674
        %v709 = vpack.c.b16 %v677, %v675
        %742 = vmatpush.bf16.msra.mxu0 %v692
        %743 = vmatpush.bf16.msra.mxu0 %v690
        %744 = vmatpush.bf16.msra.mxu0 %v688
        %745 = vmatpush.bf16.msra.mxu0 %v686
        %746 = vmatpush.bf16.msra.mxu0 %v684
        %747 = vmatpush.bf16.msra.mxu0 %v682
        %748 = vmatpush.bf16.msra.mxu0 %v680
        %749 = vmatpush.bf16.msra.mxu0 %v678
        %750 = vmatmul.bf16.gmra.mxu0 %v518
        %v751 = vpop.f32.mrf.mxu0
        %v752 = vadd.f32 0.0, %v751
        %v753 = vpop.f32.mrf.mxu0
        %v754 = vadd.f32 0.0, %v753
        %755 = vmatmul.bf16.gmra.mxu0 %v520
        %v756 = vpop.f32.mrf.mxu0
        %v757 = vadd.f32 0.0, %v756
        %v758 = vpop.f32.mrf.mxu0
        %v759 = vadd.f32 0.0, %v758
        %760 = vmatmul.bf16.gmra.mxu0 %v522
        %v761 = vpop.f32.mrf.mxu0
        %v762 = vadd.f32 0.0, %v761
        %v763 = vpop.f32.mrf.mxu0
        %v764 = vadd.f32 0.0, %v763
        %765 = vmatmul.bf16.gmra.mxu0 %v524
        %v766 = vpop.f32.mrf.mxu0
        %v767 = vadd.f32 0.0, %v766
        %v768 = vpop.f32.mrf.mxu0
        %v769 = vadd.f32 0.0, %v768
        %770 = vmatmul.bf16.gmra.mxu0 %v526
        %v771 = vpop.f32.mrf.mxu0
        %v772 = vadd.f32 0.0, %v771
        %v773 = vpop.f32.mrf.mxu0
        %v774 = vadd.f32 0.0, %v773
        %775 = vmatmul.bf16.gmra.mxu0 %v528
        %v776 = vpop.f32.mrf.mxu0
        %v777 = vadd.f32 0.0, %v776
        %v778 = vpop.f32.mrf.mxu0
        %v779 = vadd.f32 0.0, %v778
        %780 = vmatmul.bf16.gmra.mxu0 %v530
        %v781 = vpop.f32.mrf.mxu0
        %v782 = vadd.f32 0.0, %v781
        %v783 = vpop.f32.mrf.mxu0
        %v784 = vadd.f32 0.0, %v783
        %785 = vmatmul.bf16.gmra.mxu0 %v532
        %v786 = vpop.f32.mrf.mxu0
        %v787 = vadd.f32 0.0, %v786
        %v788 = vpop.f32.mrf.mxu0
        %v789 = vadd.f32 0.0, %v788
        %790 = vmatmul.bf16.gmra.mxu0 %v534
        %v791 = vpop.f32.mrf.mxu0
        %v792 = vadd.f32 0.0, %v791
        %v793 = vpop.f32.mrf.mxu0
        %v794 = vadd.f32 0.0, %v793
        %795 = vmatmul.bf16.gmra.mxu0 %v536
        %v796 = vpop.f32.mrf.mxu0
        %v797 = vadd.f32 0.0, %v796
        %v798 = vpop.f32.mrf.mxu0
        %v799 = vadd.f32 0.0, %v798
        %800 = vmatmul.bf16.gmra.mxu0 %v538
        %v801 = vpop.f32.mrf.mxu0
        %v802 = vadd.f32 0.0, %v801
        %v803 = vpop.f32.mrf.mxu0
        %v804 = vadd.f32 0.0, %v803
        %805 = vmatmul.bf16.gmra.mxu0 %v540
        %v806 = vpop.f32.mrf.mxu0
        %v807 = vadd.f32 0.0, %v806
        %v808 = vpop.f32.mrf.mxu0
        %v809 = vadd.f32 0.0, %v808
        %810 = vmatmul.bf16.gmra.mxu0 %v542
        %v811 = vpop.f32.mrf.mxu0
        %v812 = vadd.f32 0.0, %v811
        %v813 = vpop.f32.mrf.mxu0
        %v814 = vadd.f32 0.0, %v813
        %815 = vmatmul.bf16.gmra.mxu0 %v544
        %v816 = vpop.f32.mrf.mxu0
        %v817 = vadd.f32 0.0, %v816
        %v818 = vpop.f32.mrf.mxu0
        %v819 = vadd.f32 0.0, %v818
        %820 = vmatmul.bf16.gmra.mxu0 %v546
        %v821 = vpop.f32.mrf.mxu0
        %v822 = vadd.f32 0.0, %v821
        %v823 = vpop.f32.mrf.mxu0
        %v824 = vadd.f32 0.0, %v823
        %825 = vmatmul.bf16.gmra.mxu0 %v548
        %v826 = vpop.f32.mrf.mxu0
        %v827 = vadd.f32 0.0, %v826
        %v828 = vpop.f32.mrf.mxu0
        %v829 = vadd.f32 0.0, %v828
        %830 = vdwg.mxu0
        %831 = vmatpush.bf16.msra.mxu0 %v708
        %832 = vmatpush.bf16.msra.mxu0 %v706
        %833 = vmatpush.bf16.msra.mxu0 %v704
        %834 = vmatpush.bf16.msra.mxu0 %v702
        %835 = vmatpush.bf16.msra.mxu0 %v700
        %836 = vmatpush.bf16.msra.mxu0 %v698
        %837 = vmatpush.bf16.msra.mxu0 %v696
        %838 = vmatpush.bf16.msra.mxu0 %v694
        %839 = vmatmul.bf16.gmra.mxu0 %v519
        %v840 = vpop.f32.mrf.mxu0
        %v841 = vadd.f32 %v752, %v840
        %v842 = vpop.f32.mrf.mxu0
        %v843 = vadd.f32 %v754, %v842
        %844 = vmatmul.bf16.gmra.mxu0 %v521
        %v845 = vpop.f32.mrf.mxu0
        %v846 = vadd.f32 %v757, %v845
        %v847 = vpop.f32.mrf.mxu0
        %v848 = vadd.f32 %v759, %v847
        %849 = vmatmul.bf16.gmra.mxu0 %v523
        %v850 = vpop.f32.mrf.mxu0
        %v851 = vadd.f32 %v762, %v850
        %v852 = vpop.f32.mrf.mxu0
        %v853 = vadd.f32 %v764, %v852
        %854 = vmatmul.bf16.gmra.mxu0 %v525
        %v855 = vpop.f32.mrf.mxu0
        %v856 = vadd.f32 %v767, %v855
        %v857 = vpop.f32.mrf.mxu0
        %v858 = vadd.f32 %v769, %v857
        %859 = vmatmul.bf16.gmra.mxu0 %v527
        %v860 = vpop.f32.mrf.mxu0
        %v861 = vadd.f32 %v772, %v860
        %v862 = vpop.f32.mrf.mxu0
        %v863 = vadd.f32 %v774, %v862
        %864 = vmatmul.bf16.gmra.mxu0 %v529
        %v865 = vpop.f32.mrf.mxu0
        %v866 = vadd.f32 %v777, %v865
        %v867 = vpop.f32.mrf.mxu0
        %v868 = vadd.f32 %v779, %v867
        %869 = vmatmul.bf16.gmra.mxu0 %v531
        %v870 = vpop.f32.mrf.mxu0
        %v871 = vadd.f32 %v782, %v870
        %v872 = vpop.f32.mrf.mxu0
        %v873 = vadd.f32 %v784, %v872
        %874 = vmatmul.bf16.gmra.mxu0 %v533
        %v875 = vpop.f32.mrf.mxu0
        %v876 = vadd.f32 %v787, %v875
        %v877 = vpop.f32.mrf.mxu0
        %v878 = vadd.f32 %v789, %v877
        %879 = vmatmul.bf16.gmra.mxu0 %v535
        %v880 = vpop.f32.mrf.mxu0
        %v881 = vadd.f32 %v792, %v880
        %v882 = vpop.f32.mrf.mxu0
        %v883 = vadd.f32 %v794, %v882
        %884 = vmatmul.bf16.gmra.mxu0 %v537
        %v885 = vpop.f32.mrf.mxu0
        %v886 = vadd.f32 %v797, %v885
        %v887 = vpop.f32.mrf.mxu0
        %v888 = vadd.f32 %v799, %v887
        %889 = vmatmul.bf16.gmra.mxu0 %v539
        %v890 = vpop.f32.mrf.mxu0
        %v891 = vadd.f32 %v802, %v890
        %v892 = vpop.f32.mrf.mxu0
        %v893 = vadd.f32 %v804, %v892
        %894 = vmatmul.bf16.gmra.mxu0 %v541
        %v895 = vpop.f32.mrf.mxu0
        %v896 = vadd.f32 %v807, %v895
        %v897 = vpop.f32.mrf.mxu0
        %v898 = vadd.f32 %v809, %v897
        %899 = vmatmul.bf16.gmra.mxu0 %v543
        %v900 = vpop.f32.mrf.mxu0
        %v901 = vadd.f32 %v812, %v900
        %v902 = vpop.f32.mrf.mxu0
        %v903 = vadd.f32 %v814, %v902
        %904 = vmatmul.bf16.gmra.mxu0 %v545
        %v905 = vpop.f32.mrf.mxu0
        %v906 = vadd.f32 %v817, %v905
        %v907 = vpop.f32.mrf.mxu0
        %v908 = vadd.f32 %v819, %v907
        %909 = vmatmul.bf16.gmra.mxu0 %v547
        %v910 = vpop.f32.mrf.mxu0
        %v911 = vadd.f32 %v822, %v910
        %v912 = vpop.f32.mrf.mxu0
        %v913 = vadd.f32 %v824, %v912
        %914 = vmatmul.bf16.gmra.mxu0 %v549
        %v915 = vpop.f32.mrf.mxu0
        %v916 = vadd.f32 %v827, %v915
        %v917 = vpop.f32.mrf.mxu0
        %v918 = vadd.f32 %v829, %v917
        %919 = vdwg.mxu0
        %920 = vmatpush.bf16.msra.mxu0 %v693
        %921 = vmatpush.bf16.msra.mxu0 %v691
        %922 = vmatpush.bf16.msra.mxu0 %v689
        %923 = vmatpush.bf16.msra.mxu0 %v687
        %924 = vmatpush.bf16.msra.mxu0 %v685
        %925 = vmatpush.bf16.msra.mxu0 %v683
        %926 = vmatpush.bf16.msra.mxu0 %v681
        %927 = vmatpush.bf16.msra.mxu0 %v679
        %928 = vmatmul.bf16.gmra.mxu0 %v518
        %v929 = vpop.f32.mrf.mxu0
        %v930 = vadd.f32 0.0, %v929
        %v931 = vpop.f32.mrf.mxu0
        %v932 = vadd.f32 0.0, %v931
        %933 = vmatmul.bf16.gmra.mxu0 %v520
        %v934 = vpop.f32.mrf.mxu0
        %v935 = vadd.f32 0.0, %v934
        %v936 = vpop.f32.mrf.mxu0
        %v937 = vadd.f32 0.0, %v936
        %938 = vmatmul.bf16.gmra.mxu0 %v522
        %v939 = vpop.f32.mrf.mxu0
        %v940 = vadd.f32 0.0, %v939
        %v941 = vpop.f32.mrf.mxu0
        %v942 = vadd.f32 0.0, %v941
        %943 = vmatmul.bf16.gmra.mxu0 %v524
        %v944 = vpop.f32.mrf.mxu0
        %v945 = vadd.f32 0.0, %v944
        %v946 = vpop.f32.mrf.mxu0
        %v947 = vadd.f32 0.0, %v946
        %948 = vmatmul.bf16.gmra.mxu0 %v526
        %v949 = vpop.f32.mrf.mxu0
        %v950 = vadd.f32 0.0, %v949
        %v951 = vpop.f32.mrf.mxu0
        %v952 = vadd.f32 0.0, %v951
        %953 = vmatmul.bf16.gmra.mxu0 %v528
        %v954 = vpop.f32.mrf.mxu0
        %v955 = vadd.f32 0.0, %v954
        %v956 = vpop.f32.mrf.mxu0
        %v957 = vadd.f32 0.0, %v956
        %958 = vmatmul.bf16.gmra.mxu0 %v530
        %v959 = vpop.f32.mrf.mxu0
        %v960 = vadd.f32 0.0, %v959
        %v961 = vpop.f32.mrf.mxu0
        %v962 = vadd.f32 0.0, %v961
        %963 = vmatmul.bf16.gmra.mxu0 %v532
        %v964 = vpop.f32.mrf.mxu0
        %v965 = vadd.f32 0.0, %v964
        %v966 = vpop.f32.mrf.mxu0
        %v967 = vadd.f32 0.0, %v966
        %968 = vmatmul.bf16.gmra.mxu0 %v534
        %v969 = vpop.f32.mrf.mxu0
        %v970 = vadd.f32 0.0, %v969
        %v971 = vpop.f32.mrf.mxu0
        %v972 = vadd.f32 0.0, %v971
        %973 = vmatmul.bf16.gmra.mxu0 %v536
        %v974 = vpop.f32.mrf.mxu0
        %v975 = vadd.f32 0.0, %v974
        %v976 = vpop.f32.mrf.mxu0
        %v977 = vadd.f32 0.0, %v976
        %978 = vmatmul.bf16.gmra.mxu0 %v538
        %v979 = vpop.f32.mrf.mxu0
        %v980 = vadd.f32 0.0, %v979
        %v981 = vpop.f32.mrf.mxu0
        %v982 = vadd.f32 0.0, %v981
        %983 = vmatmul.bf16.gmra.mxu0 %v540
        %v984 = vpop.f32.mrf.mxu0
        %v985 = vadd.f32 0.0, %v984
        %v986 = vpop.f32.mrf.mxu0
        %v987 = vadd.f32 0.0, %v986
        %988 = vmatmul.bf16.gmra.mxu0 %v542
        %v989 = vpop.f32.mrf.mxu0
        %v990 = vadd.f32 0.0, %v989
        %v991 = vpop.f32.mrf.mxu0
        %v992 = vadd.f32 0.0, %v991
        %993 = vmatmul.bf16.gmra.mxu0 %v544
        %v994 = vpop.f32.mrf.mxu0
        %v995 = vadd.f32 0.0, %v994
        %v996 = vpop.f32.mrf.mxu0
        %v997 = vadd.f32 0.0, %v996
        %998 = vmatmul.bf16.gmra.mxu0 %v546
        %v999 = vpop.f32.mrf.mxu0
        %v1000 = vadd.f32 0.0, %v999
        %v1001 = vpop.f32.mrf.mxu0
        %v1002 = vadd.f32 0.0, %v1001
        %1003 = vmatmul.bf16.gmra.mxu0 %v548
        %v1004 = vpop.f32.mrf.mxu0
        %v1005 = vadd.f32 0.0, %v1004
        %v1006 = vpop.f32.mrf.mxu0
        %v1007 = vadd.f32 0.0, %v1006
        %1008 = vdwg.mxu0
        %1009 = vmatpush.bf16.msra.mxu0 %v709
        %1010 = vmatpush.bf16.msra.mxu0 %v707
        %1011 = vmatpush.bf16.msra.mxu0 %v705
        %1012 = vmatpush.bf16.msra.mxu0 %v703
        %1013 = vmatpush.bf16.msra.mxu0 %v701
        %1014 = vmatpush.bf16.msra.mxu0 %v699
        %1015 = vmatpush.bf16.msra.mxu0 %v697
        %1016 = vmatpush.bf16.msra.mxu0 %v695
        %1017 = vmatmul.bf16.gmra.mxu0 %v519
        %v1018 = vpop.f32.mrf.mxu0
        %v1019 = vadd.f32 %v930, %v1018
        %v1020 = vpop.f32.mrf.mxu0
        %v1021 = vadd.f32 %v932, %v1020
        %1022 = vmatmul.bf16.gmra.mxu0 %v521
        %v1023 = vpop.f32.mrf.mxu0
        %v1024 = vadd.f32 %v935, %v1023
        %v1025 = vpop.f32.mrf.mxu0
        %v1026 = vadd.f32 %v937, %v1025
        %1027 = vmatmul.bf16.gmra.mxu0 %v523
        %v1028 = vpop.f32.mrf.mxu0
        %v1029 = vadd.f32 %v940, %v1028
        %v1030 = vpop.f32.mrf.mxu0
        %v1031 = vadd.f32 %v942, %v1030
        %1032 = vmatmul.bf16.gmra.mxu0 %v525
        %v1033 = vpop.f32.mrf.mxu0
        %v1034 = vadd.f32 %v945, %v1033
        %v1035 = vpop.f32.mrf.mxu0
        %v1036 = vadd.f32 %v947, %v1035
        %1037 = vmatmul.bf16.gmra.mxu0 %v527
        %v1038 = vpop.f32.mrf.mxu0
        %v1039 = vadd.f32 %v950, %v1038
        %v1040 = vpop.f32.mrf.mxu0
        %v1041 = vadd.f32 %v952, %v1040
        %1042 = vmatmul.bf16.gmra.mxu0 %v529
        %v1043 = vpop.f32.mrf.mxu0
        %v1044 = vadd.f32 %v955, %v1043
        %v1045 = vpop.f32.mrf.mxu0
        %v1046 = vadd.f32 %v957, %v1045
        %1047 = vmatmul.bf16.gmra.mxu0 %v531
        %v1048 = vpop.f32.mrf.mxu0
        %v1049 = vadd.f32 %v960, %v1048
        %v1050 = vpop.f32.mrf.mxu0
        %v1051 = vadd.f32 %v962, %v1050
        %1052 = vmatmul.bf16.gmra.mxu0 %v533
        %v1053 = vpop.f32.mrf.mxu0
        %v1054 = vadd.f32 %v965, %v1053
        %v1055 = vpop.f32.mrf.mxu0
        %v1056 = vadd.f32 %v967, %v1055
        %1057 = vmatmul.bf16.gmra.mxu0 %v535
        %v1058 = vpop.f32.mrf.mxu0
        %v1059 = vadd.f32 %v970, %v1058
        %v1060 = vpop.f32.mrf.mxu0
        %v1061 = vadd.f32 %v972, %v1060
        %1062 = vmatmul.bf16.gmra.mxu0 %v537
        %v1063 = vpop.f32.mrf.mxu0
        %v1064 = vadd.f32 %v975, %v1063
        %v1065 = vpop.f32.mrf.mxu0
        %v1066 = vadd.f32 %v977, %v1065
        %1067 = vmatmul.bf16.gmra.mxu0 %v539
        %v1068 = vpop.f32.mrf.mxu0
        %v1069 = vadd.f32 %v980, %v1068
        %v1070 = vpop.f32.mrf.mxu0
        %v1071 = vadd.f32 %v982, %v1070
        %1072 = vmatmul.bf16.gmra.mxu0 %v541
        %v1073 = vpop.f32.mrf.mxu0
        %v1074 = vadd.f32 %v985, %v1073
        %v1075 = vpop.f32.mrf.mxu0
        %v1076 = vadd.f32 %v987, %v1075
        %1077 = vmatmul.bf16.gmra.mxu0 %v543
        %v1078 = vpop.f32.mrf.mxu0
        %v1079 = vadd.f32 %v990, %v1078
        %v1080 = vpop.f32.mrf.mxu0
        %v1081 = vadd.f32 %v992, %v1080
        %1082 = vmatmul.bf16.gmra.mxu0 %v545
        %v1083 = vpop.f32.mrf.mxu0
        %v1084 = vadd.f32 %v995, %v1083
        %v1085 = vpop.f32.mrf.mxu0
        %v1086 = vadd.f32 %v997, %v1085
        %1087 = vmatmul.bf16.gmra.mxu0 %v547
        %v1088 = vpop.f32.mrf.mxu0
        %v1089 = vadd.f32 %v1000, %v1088
        %v1090 = vpop.f32.mrf.mxu0
        %v1091 = vadd.f32 %v1002, %v1090
        %1092 = vmatmul.bf16.gmra.mxu0 %v549
        %v1093 = vpop.f32.mrf.mxu0
        %v1094 = vadd.f32 %v1005, %v1093
        %v1095 = vpop.f32.mrf.mxu0
        %v1096 = vadd.f32 %v1007, %v1095
        %1097 = vdwg.mxu0
        %v1098 = vadd.f32 %v294, %v841
        %v1099 = vadd.f32 %v295, %v1019
        %v1100 = vadd.f32 %v296, %v843
        %v1101 = vadd.f32 %v297, %v1021
        %v1102 = vadd.f32 %v298, %v846
        %v1103 = vadd.f32 %v299, %v1024
        %v1104 = vadd.f32 %v300, %v848
        %v1105 = vadd.f32 %v301, %v1026
        %v1106 = vadd.f32 %v302, %v851
        %v1107 = vadd.f32 %v303, %v1029
        %v1108 = vadd.f32 %v304, %v853
        %v1109 = vadd.f32 %v305, %v1031
        %v1110 = vadd.f32 %v306, %v856
        %v1111 = vadd.f32 %v307, %v1034
        %v1112 = vadd.f32 %v308, %v858
        %v1113 = vadd.f32 %v309, %v1036
        %v1114 = vadd.f32 %v310, %v861
        %v1115 = vadd.f32 %v311, %v1039
        %v1116 = vadd.f32 %v312, %v863
        %v1117 = vadd.f32 %v313, %v1041
        %v1118 = vadd.f32 %v314, %v866
        %v1119 = vadd.f32 %v315, %v1044
        %v1120 = vadd.f32 %v316, %v868
        %v1121 = vadd.f32 %v317, %v1046
        %v1122 = vadd.f32 %v318, %v871
        %v1123 = vadd.f32 %v319, %v1049
        %v1124 = vadd.f32 %v320, %v873
        %v1125 = vadd.f32 %v321, %v1051
        %v1126 = vadd.f32 %v322, %v876
        %v1127 = vadd.f32 %v323, %v1054
        %v1128 = vadd.f32 %v324, %v878
        %v1129 = vadd.f32 %v325, %v1056
        %v1130 = vadd.f32 %v326, %v881
        %v1131 = vadd.f32 %v327, %v1059
        %v1132 = vadd.f32 %v328, %v883
        %v1133 = vadd.f32 %v329, %v1061
        %v1134 = vadd.f32 %v330, %v886
        %v1135 = vadd.f32 %v331, %v1064
        %v1136 = vadd.f32 %v332, %v888
        %v1137 = vadd.f32 %v333, %v1066
        %v1138 = vadd.f32 %v334, %v891
        %v1139 = vadd.f32 %v335, %v1069
        %v1140 = vadd.f32 %v336, %v893
        %v1141 = vadd.f32 %v337, %v1071
        %v1142 = vadd.f32 %v338, %v896
        %v1143 = vadd.f32 %v339, %v1074
        %v1144 = vadd.f32 %v340, %v898
        %v1145 = vadd.f32 %v341, %v1076
        %v1146 = vadd.f32 %v342, %v901
        %v1147 = vadd.f32 %v343, %v1079
        %v1148 = vadd.f32 %v344, %v903
        %v1149 = vadd.f32 %v345, %v1081
        %v1150 = vadd.f32 %v346, %v906
        %v1151 = vadd.f32 %v347, %v1084
        %v1152 = vadd.f32 %v348, %v908
        %v1153 = vadd.f32 %v349, %v1086
        %v1154 = vadd.f32 %v350, %v911
        %v1155 = vadd.f32 %v351, %v1089
        %v1156 = vadd.f32 %v352, %v913
        %v1157 = vadd.f32 %v353, %v1091
        %v1158 = vadd.f32 %v354, %v916
        %v1159 = vadd.f32 %v355, %v1094
        %v1160 = vadd.f32 %v356, %v918
        %v1161 = vadd.f32 %v357, %v1096
        %1162 = vst [vmem:[#allocation2] sm:$0xff] %v1098
        %1163 = vst [vmem:[#allocation2 + $0x8] sm:$0xff] %v1099
        %1164 = vst [vmem:[#allocation2 + $0x10] sm:$0xff] %v1100
        %1165 = vst [vmem:[#allocation2 + $0x18] sm:$0xff] %v1101
        %1166 = vst [vmem:[#allocation2 + $0x20] sm:$0xff] %v1102
        %1167 = vst [vmem:[#allocation2 + $0x28] sm:$0xff] %v1103
        %1168 = vst [vmem:[#allocation2 + $0x30] sm:$0xff] %v1104
        %1169 = vst [vmem:[#allocation2 + $0x38] sm:$0xff] %v1105
        %1170 = vst [vmem:[#allocation2 + $0x40] sm:$0xff] %v1106
        %1171 = vst [vmem:[#allocation2 + $0x48] sm:$0xff] %v1107
        %1172 = vst [vmem:[#allocation2 + $0x50] sm:$0xff] %v1108
        %1173 = vst [vmem:[#allocation2 + $0x58] sm:$0xff] %v1109
        %1174 = vst [vmem:[#allocation2 + $0x60] sm:$0xff] %v1110
        %1175 = vst [vmem:[#allocation2 + $0x68] sm:$0xff] %v1111
        %1176 = vst [vmem:[#allocation2 + $0x70] sm:$0xff] %v1112
        %1177 = vst [vmem:[#allocation2 + $0x78] sm:$0xff] %v1113
        %1178 = vst [vmem:[#allocation2 + $0x80] sm:$0xff] %v1114
        %1179 = vst [vmem:[#allocation2 + $0x88] sm:$0xff] %v1115
        %1180 = vst [vmem:[#allocation2 + $0x90] sm:$0xff] %v1116
        %1181 = vst [vmem:[#allocation2 + $0x98] sm:$0xff] %v1117
        %1182 = vst [vmem:[#allocation2 + $0xa0] sm:$0xff] %v1118
        %1183 = vst [vmem:[#allocation2 + $0xa8] sm:$0xff] %v1119
        %1184 = vst [vmem:[#allocation2 + $0xb0] sm:$0xff] %v1120
        %1185 = vst [vmem:[#allocation2 + $0xb8] sm:$0xff] %v1121
        %1186 = vst [vmem:[#allocation2 + $0xc0] sm:$0xff] %v1122
        %1187 = vst [vmem:[#allocation2 + $0xc8] sm:$0xff] %v1123
        %1188 = vst [vmem:[#allocation2 + $0xd0] sm:$0xff] %v1124
        %1189 = vst [vmem:[#allocation2 + $0xd8] sm:$0xff] %v1125
        %1190 = vst [vmem:[#allocation2 + $0xe0] sm:$0xff] %v1126
        %1191 = vst [vmem:[#allocation2 + $0xe8] sm:$0xff] %v1127
        %1192 = vst [vmem:[#allocation2 + $0xf0] sm:$0xff] %v1128
        %1193 = vst [vmem:[#allocation2 + $0xf8] sm:$0xff] %v1129
        %1194 = vst [vmem:[#allocation2 + $0x100] sm:$0xff] %v1130
        %1195 = vst [vmem:[#allocation2 + $0x108] sm:$0xff] %v1131
        %1196 = vst [vmem:[#allocation2 + $0x110] sm:$0xff] %v1132
        %1197 = vst [vmem:[#allocation2 + $0x118] sm:$0xff] %v1133
        %1198 = vst [vmem:[#allocation2 + $0x120] sm:$0xff] %v1134
        %1199 = vst [vmem:[#allocation2 + $0x128] sm:$0xff] %v1135
        %1200 = vst [vmem:[#allocation2 + $0x130] sm:$0xff] %v1136
        %1201 = vst [vmem:[#allocation2 + $0x138] sm:$0xff] %v1137
        %1202 = vst [vmem:[#allocation2 + $0x140] sm:$0xff] %v1138
        %1203 = vst [vmem:[#allocation2 + $0x148] sm:$0xff] %v1139
        %1204 = vst [vmem:[#allocation2 + $0x150] sm:$0xff] %v1140
        %1205 = vst [vmem:[#allocation2 + $0x158] sm:$0xff] %v1141
        %1206 = vst [vmem:[#allocation2 + $0x160] sm:$0xff] %v1142
        %1207 = vst [vmem:[#allocation2 + $0x168] sm:$0xff] %v1143
        %1208 = vst [vmem:[#allocation2 + $0x170] sm:$0xff] %v1144
        %1209 = vst [vmem:[#allocation2 + $0x178] sm:$0xff] %v1145
        %1210 = vst [vmem:[#allocation2 + $0x180] sm:$0xff] %v1146
        %1211 = vst [vmem:[#allocation2 + $0x188] sm:$0xff] %v1147
        %1212 = vst [vmem:[#allocation2 + $0x190] sm:$0xff] %v1148
        %1213 = vst [vmem:[#allocation2 + $0x198] sm:$0xff] %v1149
        %1214 = vst [vmem:[#allocation2 + $0x1a0] sm:$0xff] %v1150
        %1215 = vst [vmem:[#allocation2 + $0x1a8] sm:$0xff] %v1151
        %1216 = vst [vmem:[#allocation2 + $0x1b0] sm:$0xff] %v1152
        %1217 = vst [vmem:[#allocation2 + $0x1b8] sm:$0xff] %v1153
        %1218 = vst [vmem:[#allocation2 + $0x1c0] sm:$0xff] %v1154
        %1219 = vst [vmem:[#allocation2 + $0x1c8] sm:$0xff] %v1155
        %1220 = vst [vmem:[#allocation2 + $0x1d0] sm:$0xff] %v1156
        %1221 = vst [vmem:[#allocation2 + $0x1d8] sm:$0xff] %v1157
        %1222 = vst [vmem:[#allocation2 + $0x1e0] sm:$0xff] %v1158
        %1223 = vst [vmem:[#allocation2 + $0x1e8] sm:$0xff] %v1159
        %1224 = vst [vmem:[#allocation2 + $0x1f0] sm:$0xff] %v1160
        %1225 = vst [vmem:[#allocation2 + $0x1f8] sm:$0xff] %v1161
        // Predicated region
        $region41: #{tpu_custom_call.1} parent=27 // pred_check
          %p1226 = pneg %p226
        $region42: #{tpu_custom_call.1} parent=27 // pred_check_branch
          %1228 = sbr.rel (%p1226) target = $region44
        $region43: #{tpu_custom_call.1} parent=27 // pred_region
          %v1229 = vld [vmem:[#allocation2] sm:$0xff]
          %v1230 = vld [vmem:[#allocation2 + $0x8] sm:$0xff]
          %v1231 = vld [vmem:[#allocation2 + $0x10] sm:$0xff]
          %v1232 = vld [vmem:[#allocation2 + $0x18] sm:$0xff]
          %v1233 = vld [vmem:[#allocation2 + $0x20] sm:$0xff]
          %v1234 = vld [vmem:[#allocation2 + $0x28] sm:$0xff]
          %v1235 = vld [vmem:[#allocation2 + $0x30] sm:$0xff]
          %v1236 = vld [vmem:[#allocation2 + $0x38] sm:$0xff]
          %v1237 = vld [vmem:[#allocation2 + $0x40] sm:$0xff]
          %v1238 = vld [vmem:[#allocation2 + $0x48] sm:$0xff]
          %v1239 = vld [vmem:[#allocation2 + $0x50] sm:$0xff]
          %v1240 = vld [vmem:[#allocation2 + $0x58] sm:$0xff]
          %v1241 = vld [vmem:[#allocation2 + $0x60] sm:$0xff]
          %v1242 = vld [vmem:[#allocation2 + $0x68] sm:$0xff]
          %v1243 = vld [vmem:[#allocation2 + $0x70] sm:$0xff]
          %v1244 = vld [vmem:[#allocation2 + $0x78] sm:$0xff]
          %v1245 = vld [vmem:[#allocation2 + $0x80] sm:$0xff]
          %v1246 = vld [vmem:[#allocation2 + $0x88] sm:$0xff]
          %v1247 = vld [vmem:[#allocation2 + $0x90] sm:$0xff]
          %v1248 = vld [vmem:[#allocation2 + $0x98] sm:$0xff]
          %v1249 = vld [vmem:[#allocation2 + $0xa0] sm:$0xff]
          %v1250 = vld [vmem:[#allocation2 + $0xa8] sm:$0xff]
          %v1251 = vld [vmem:[#allocation2 + $0xb0] sm:$0xff]
          %v1252 = vld [vmem:[#allocation2 + $0xb8] sm:$0xff]
          %v1253 = vld [vmem:[#allocation2 + $0xc0] sm:$0xff]
          %v1254 = vld [vmem:[#allocation2 + $0xc8] sm:$0xff]
          %v1255 = vld [vmem:[#allocation2 + $0xd0] sm:$0xff]
          %v1256 = vld [vmem:[#allocation2 + $0xd8] sm:$0xff]
          %v1257 = vld [vmem:[#allocation2 + $0xe0] sm:$0xff]
          %v1258 = vld [vmem:[#allocation2 + $0xe8] sm:$0xff]
          %v1259 = vld [vmem:[#allocation2 + $0xf0] sm:$0xff]
          %v1260 = vld [vmem:[#allocation2 + $0xf8] sm:$0xff]
          %v1261 = vld [vmem:[#allocation2 + $0x100] sm:$0xff]
          %v1262 = vld [vmem:[#allocation2 + $0x108] sm:$0xff]
          %v1263 = vld [vmem:[#allocation2 + $0x110] sm:$0xff]
          %v1264 = vld [vmem:[#allocation2 + $0x118] sm:$0xff]
          %v1265 = vld [vmem:[#allocation2 + $0x120] sm:$0xff]
          %v1266 = vld [vmem:[#allocation2 + $0x128] sm:$0xff]
          %v1267 = vld [vmem:[#allocation2 + $0x130] sm:$0xff]
          %v1268 = vld [vmem:[#allocation2 + $0x138] sm:$0xff]
          %v1269 = vld [vmem:[#allocation2 + $0x140] sm:$0xff]
          %v1270 = vld [vmem:[#allocation2 + $0x148] sm:$0xff]
          %v1271 = vld [vmem:[#allocation2 + $0x150] sm:$0xff]
          %v1272 = vld [vmem:[#allocation2 + $0x158] sm:$0xff]
          %v1273 = vld [vmem:[#allocation2 + $0x160] sm:$0xff]
          %v1274 = vld [vmem:[#allocation2 + $0x168] sm:$0xff]
          %v1275 = vld [vmem:[#allocation2 + $0x170] sm:$0xff]
          %v1276 = vld [vmem:[#allocation2 + $0x178] sm:$0xff]
          %v1277 = vld [vmem:[#allocation2 + $0x180] sm:$0xff]
          %v1278 = vld [vmem:[#allocation2 + $0x188] sm:$0xff]
          %v1279 = vld [vmem:[#allocation2 + $0x190] sm:$0xff]
          %v1280 = vld [vmem:[#allocation2 + $0x198] sm:$0xff]
          %v1281 = vld [vmem:[#allocation2 + $0x1a0] sm:$0xff]
          %v1282 = vld [vmem:[#allocation2 + $0x1a8] sm:$0xff]
          %v1283 = vld [vmem:[#allocation2 + $0x1b0] sm:$0xff]
          %v1284 = vld [vmem:[#allocation2 + $0x1b8] sm:$0xff]
          %v1285 = vld [vmem:[#allocation2 + $0x1c0] sm:$0xff]
          %v1286 = vld [vmem:[#allocation2 + $0x1c8] sm:$0xff]
          %v1287 = vld [vmem:[#allocation2 + $0x1d0] sm:$0xff]
          %v1288 = vld [vmem:[#allocation2 + $0x1d8] sm:$0xff]
          %v1289 = vld [vmem:[#allocation2 + $0x1e0] sm:$0xff]
          %v1290 = vld [vmem:[#allocation2 + $0x1e8] sm:$0xff]
          %v1291 = vld [vmem:[#allocation2 + $0x1f0] sm:$0xff]
          %v1292 = vld [vmem:[#allocation2 + $0x1f8] sm:$0xff]
          %v1293 = vpack.c.bf16 %v1230, %v1229
          %v1294 = vpack.c.bf16 %v1232, %v1231
          %v1295 = vpack.c.bf16 %v1234, %v1233
          %v1296 = vpack.c.bf16 %v1236, %v1235
          %v1297 = vpack.c.bf16 %v1238, %v1237
          %v1298 = vpack.c.bf16 %v1240, %v1239
          %v1299 = vpack.c.bf16 %v1242, %v1241
          %v1300 = vpack.c.bf16 %v1244, %v1243
          %v1301 = vpack.c.bf16 %v1246, %v1245
          %v1302 = vpack.c.bf16 %v1248, %v1247
          %v1303 = vpack.c.bf16 %v1250, %v1249
          %v1304 = vpack.c.bf16 %v1252, %v1251
          %v1305 = vpack.c.bf16 %v1254, %v1253
          %v1306 = vpack.c.bf16 %v1256, %v1255
          %v1307 = vpack.c.bf16 %v1258, %v1257
          %v1308 = vpack.c.bf16 %v1260, %v1259
          %v1309 = vpack.c.bf16 %v1262, %v1261
          %v1310 = vpack.c.bf16 %v1264, %v1263
          %v1311 = vpack.c.bf16 %v1266, %v1265
          %v1312 = vpack.c.bf16 %v1268, %v1267
          %v1313 = vpack.c.bf16 %v1270, %v1269
          %v1314 = vpack.c.bf16 %v1272, %v1271
          %v1315 = vpack.c.bf16 %v1274, %v1273
          %v1316 = vpack.c.bf16 %v1276, %v1275
          %v1317 = vpack.c.bf16 %v1278, %v1277
          %v1318 = vpack.c.bf16 %v1280, %v1279
          %v1319 = vpack.c.bf16 %v1282, %v1281
          %v1320 = vpack.c.bf16 %v1284, %v1283
          %v1321 = vpack.c.bf16 %v1286, %v1285
          %v1322 = vpack.c.bf16 %v1288, %v1287
          %v1323 = vpack.c.bf16 %v1290, %v1289
          %v1324 = vpack.c.bf16 %v1292, %v1291
          %1325 = vst [vmem:[%s219] sm:$0xff] %v1293
          %1326 = vst [vmem:[%s219 + $0x8] sm:$0xff] %v1294
          %1327 = vst [vmem:[%s219 + $0x10] sm:$0xff] %v1295
          %1328 = vst [vmem:[%s219 + $0x18] sm:$0xff] %v1296
          %1329 = vst [vmem:[%s219 + $0x20] sm:$0xff] %v1297
          %1330 = vst [vmem:[%s219 + $0x28] sm:$0xff] %v1298
          %1331 = vst [vmem:[%s219 + $0x30] sm:$0xff] %v1299
          %1332 = vst [vmem:[%s219 + $0x38] sm:$0xff] %v1300
          %1333 = vst [vmem:[%s219 + $0x40] sm:$0xff] %v1301
          %1334 = vst [vmem:[%s219 + $0x48] sm:$0xff] %v1302
          %1335 = vst [vmem:[%s219 + $0x50] sm:$0xff] %v1303
          %1336 = vst [vmem:[%s219 + $0x58] sm:$0xff] %v1304
          %1337 = vst [vmem:[%s219 + $0x60] sm:$0xff] %v1305
          %1338 = vst [vmem:[%s219 + $0x68] sm:$0xff] %v1306
          %1339 = vst [vmem:[%s219 + $0x70] sm:$0xff] %v1307
          %1340 = vst [vmem:[%s219 + $0x78] sm:$0xff] %v1308
          %1341 = vst [vmem:[%s219 + $0x80] sm:$0xff] %v1309
          %1342 = vst [vmem:[%s219 + $0x88] sm:$0xff] %v1310
          %1343 = vst [vmem:[%s219 + $0x90] sm:$0xff] %v1311
          %1344 = vst [vmem:[%s219 + $0x98] sm:$0xff] %v1312
          %1345 = vst [vmem:[%s219 + $0xa0] sm:$0xff] %v1313
          %1346 = vst [vmem:[%s219 + $0xa8] sm:$0xff] %v1314
          %1347 = vst [vmem:[%s219 + $0xb0] sm:$0xff] %v1315
          %1348 = vst [vmem:[%s219 + $0xb8] sm:$0xff] %v1316
          %1349 = vst [vmem:[%s219 + $0xc0] sm:$0xff] %v1317
          %1350 = vst [vmem:[%s219 + $0xc8] sm:$0xff] %v1318
          %1351 = vst [vmem:[%s219 + $0xd0] sm:$0xff] %v1319
          %1352 = vst [vmem:[%s219 + $0xd8] sm:$0xff] %v1320
          %1353 = vst [vmem:[%s219 + $0xe0] sm:$0xff] %v1321
          %1354 = vst [vmem:[%s219 + $0xe8] sm:$0xff] %v1322
          %1355 = vst [vmem:[%s219 + $0xf0] sm:$0xff] %v1323
          %1356 = vst [vmem:[%s219 + $0xf8] sm:$0xff] %v1324
        $region44: #{tpu_custom_call.1} parent=27 // pred_fallthru
          _
        %s1357 = sand.u32 %s105, 1
        %s1358 = scalar_lea.sflag [#allocation5], %s1357
        %s1359 = sand.u32 %s105, 1
        %s1360 = smul.addr %s1359, 256
        %s1361 = scalar_lea.vmem [#allocation8], %s1360
        // Predicated region
        $region45: #{tpu_custom_call.1} parent=27 // pred_check
          %p1362 = pneg %p115
        $region46: #{tpu_custom_call.1} parent=27 // pred_check_branch
          %1364 = sbr.rel (%p1362) target = $region48
        $region47: #{tpu_custom_call.1} parent=27 // pred_region
          %s1365 = smul.u32 32, %s25
          %s1366 = smul.u32 2, %s26
          %1368 = vsyncadd %s1358, 0
          %s1369 = smul.addr %s1365, 2
          %s1370 = sadd.s32 %s1366, %s1369
          %s1371 = smul.addr %s1370, 4
          %s1372 = scalar_lea.hbm %s2, %s1371
          %s1373 = sshll.u32 %s1361, 4
          %s1374 = int_to_ptr.vmem [resolvable:$true] %s1373
          %s1375 = sshll.u32 %s1372, 4
          %s1376 = int_to_ptr.hbm [resolvable:$true] %s1375
          %1381 = dma.vmem_to_hbm [thread:$0]  %s1374, 4096, %s1376, %s1358, 128, 128, 8
        $region48: #{tpu_custom_call.1} parent=27 // pred_fallthru
          _
      $region28: #{tpu_custom_call.1} parent=5 // pred_fallthru
        _
      %p1382 = scmp.le.s32.totalorder 2, %s15
      // Predicated region
      $region49: #{tpu_custom_call.1} parent=5 // pred_check
        %p1383 = pneg %p1382
      $region50: #{tpu_custom_call.1} parent=5 // pred_check_branch
        %1385 = sbr.rel (%p1383) target = $region52
      $region51: #{tpu_custom_call.1} parent=5 // pred_region
        %s1386 = ssub.s32 %s15, 2
        // Predicated region
        $region53: #{tpu_custom_call.1} parent=51 // pred_check
          %p1387 = pneg %p121
        $region54: #{tpu_custom_call.1} parent=51 // pred_check_branch
          %1389 = sbr.rel (%p1387) target = $region56
        $region55: #{tpu_custom_call.1} parent=51 // pred_region
          %s1390 = sand.u32 %s106, 1
          %s1391 = scalar_lea.sflag [#allocation5], %s1390
          %s1392 = sand.u32 %s106, 1
          %s1393 = smul.addr %s1392, 256
          %s1394 = scalar_lea.vmem [#allocation8], %s1393
          %1396 = dma.done %s1391, 4096
        $region56: #{tpu_custom_call.1} parent=51 // pred_fallthru
          _
      $region52: #{tpu_custom_call.1} parent=5 // pred_fallthru
        _
    $region6: #{tpu_custom_call.1} parent=1 // loop_footer
      %s19 = sadd.s32 1, %s15
    $region7: #{tpu_custom_call.1} parent=1 // loop_footer_branch
      %14 = sbr.rel target = $region3
    $region8: #{tpu_custom_call.1} parent=1 // loop_exit
      _
    %1397 = vsyncpa [#allocation4], 1
    %s1398 = scalar_lea.sflag [#allocation4], 1
    %1399 = vsyncpa %s1398, 1
    %1400 = vsyncpa [#allocation7], 1
    %1401 = vsyncpa [#allocation5], 1
    %s1402 = scalar_lea.sflag [#allocation5], 1
    %1403 = vsyncpa %s1402, 1

</llo_original>
